<compile_context>
chip_gen: v7x
topology: tpu7x:2x2x1
jax: 0.10.0
libtpu: 0.0.40
codegen_flags: <defaults>
</compile_context>

<pallas_src>
import functools

import jax
import jax.numpy as jnp
from jax.experimental import pallas as pl
from jax.experimental.pallas import tpu as pltpu


def _reghead_kernel(x_ref, w_ref, b_ref, o_ref, *, inv_hw):
    # x_ref: (N, C, HW)  activation, spatial flattened (native NCHW, no transpose)
    # w_ref: (C, T)      weight tile (transposed, zero-padded along T)
    # b_ref: (1, T)      bias tile (zero-padded along T)
    # o_ref: (N, T)      output tile (T multiple of 128 -> unmasked stores)
    pooled = jnp.sum(x_ref[...], axis=-1) * inv_hw              # (N, C) avg-pool
    y = jnp.dot(pooled.astype(w_ref.dtype), w_ref[...],
                preferred_element_type=jnp.float32)             # (N, T) on MXU
    o_ref[...] = (y + b_ref[...]).astype(o_ref.dtype)           # f32 epilogue


def prepare_reghead_params(weight, bias, *, param_dtype=jnp.float32,
                           lane_multiple=128):
    """One-time (parameter-load-time) weight/bias preparation.

    weight: (OUT, C) PyTorch nn.Linear layout
    bias:   (OUT,)
    Returns (w_t, b2d, out_unit) where
      w_t: (C, OUT_pad) transposed, zero-padded, optionally bf16
      b2d: (1, OUT_pad) f32, zero-padded
    """
    out_unit, c = weight.shape
    out_pad = ((out_unit + lane_multiple - 1) // lane_multiple) * lane_multiple
    w_t = jnp.pad(weight.T.astype(param_dtype),
                  ((0, 0), (0, out_pad - out_unit)))             # (C, OUT_pad)
    b2d = jnp.pad(bias.astype(jnp.float32).reshape(1, out_unit),
                  ((0, 0), (0, out_pad - out_unit)))             # (1, OUT_pad)
    return w_t, b2d, out_unit


def reg_head(x_nchw, w_t, b2d, out_unit, *, num_out_tiles=1):
    """RegHead forward: AdaptiveAvgPool2d((1,1)) -> flatten -> dropout(eval) -> Linear.

    x_nchw:   (N, C, H, W) float32
    w_t, b2d: outputs of prepare_reghead_params (cached across calls)
    out_unit: true number of output units (pre-padding)
    num_out_tiles: 1 (default, best on v5e/v6e) or 2 (v7x megacore sharding)
    returns (N, out_unit) float32
    """
    n, c, h, w = x_nchw.shape
    c_w, out_pad = w_t.shape
    assert c_w == c, "Linear in_features must match channel count"
    assert out_pad % (128 * num_out_tiles) == 0
    out_tile = out_pad // num_out_tiles

    hw = h * w
    x3d = x_nchw.reshape(n, c, hw)                 # free reshape, no HBM pass
    kernel = functools.partial(_reghead_kernel, inv_hw=1.0 / float(hw))

    out = pl.pallas_call(
        kernel,
        out_shape=jax.ShapeDtypeStruct((n, out_pad), jnp.float32),
        grid_spec=pltpu.PrefetchScalarGridSpec(
            num_scalar_prefetch=0,
            grid=(num_out_tiles,),
            in_specs=[
                # Full activation block, constant block index -> DMA'd once.
                pl.BlockSpec((n, c, hw), lambda j: (0, 0, 0)),
                pl.BlockSpec((c, out_tile), lambda j: (0, j)),
                pl.BlockSpec((1, out_tile), lambda j: (0, j)),
            ],
            out_specs=pl.BlockSpec((n, out_tile), lambda j: (0, j)),
        ),
        compiler_params=pltpu.CompilerParams(
            dimension_semantics=("parallel",),      # only matters for num_out_tiles=2 (v7x)
            vmem_limit_bytes=32 * 1024 * 1024,
        ),
    )(x3d, w_t, b2d)

    return out[:, :out_unit]                        # drop padded channels


def _reference(x_nchw, weight, bias):
    # Pure-JAX reference: global avg pool -> flatten -> (eval dropout) -> linear.
    pooled = jnp.mean(x_nchw, axis=(2, 3))          # (N, C)
    return pooled @ weight.T + bias


if __name__ == "__main__":
    key = jax.random.PRNGKey(0)
    k_x, k_w, k_b = jax.random.split(key, 3)

    # Shapes consistent with RegHead defaults: in_unit=368, out_unit=1000.
    N, C_IN, OUT, H, W = 2, 368, 1000, 7, 7

    x = jax.random.normal(k_x, (N, C_IN, H, W), dtype=jnp.float32)
    weight = jax.random.normal(k_w, (OUT, C_IN), dtype=jnp.float32) * 0.05
    bias = 0.1 * jax.random.normal(k_b, (OUT,), dtype=jnp.float32)

    # One-time parameter prep (hoisted out of the per-call hot path).
    w_t, b2d, out_unit = prepare_reghead_params(weight, bias)

    out = reg_head(x, w_t, b2d, out_unit)
    out = jax.block_until_ready(out)

    ref = _reference(x, weight, bias)
    assert out.shape == (N, OUT)
    assert jnp.allclose(out, ref, atol=1e-4, rtol=1e-4), "mismatch vs reference"

    print("KERNEL_OK")
</pallas_src>

<mosaic_0001>
module attributes {stable_mosaic.version = 11 : i64} {
  func.func @_reghead_kernel(%arg0: i32, %arg1: memref<2x368x49xf32, #tpu.memory_space<vmem>>, %arg2: memref<368x1024xf32, #tpu.memory_space<vmem>>, %arg3: memref<1x1024xf32, #tpu.memory_space<vmem>>, %arg4: memref<2x1024xf32, #tpu.memory_space<vmem>>) attributes {dimension_semantics = [#tpu.dimension_semantics<parallel>], iteration_bounds = array<i64: 1>, scalar_prefetch = 0 : i64, scratch_operands = 0 : i64, tpu.core_type = #tpu.core_type<tc>, window_params = [{pipeline_mode = #tpu.pipeline_mode<synchronous>, transform_indices = @transform_0, window_bounds = array<i64: 2, 368, 49>}, {transform_indices = @transform_1, window_bounds = array<i64: 368, 1024>}, {transform_indices = @transform_2, window_bounds = array<i64: 1, 1024>}, {transform_indices = @transform_3, window_bounds = array<i64: 2, 1024>}]} {
    %c0 = arith.constant 0 : index
    %c0_0 = arith.constant 0 : index
    %c0_1 = arith.constant 0 : index
    %0 = vector.load %arg1[%c0, %c0_0, %c0_1] : memref<2x368x49xf32, #tpu.memory_space<vmem>>, vector<2x368x49xf32>
    %cst = arith.constant dense<0.000000e+00> : vector<2x368xf32>
    %1 = vector.multi_reduction <add>, %0, %cst [2] : vector<2x368x49xf32> to vector<2x368xf32>
    %cst_2 = arith.constant 0.0204081628 : f32
    %2 = vector.broadcast %cst_2 : f32 to vector<2x368xf32>
    %3 = arith.mulf %1, %2 : vector<2x368xf32>
    %c0_3 = arith.constant 0 : index
    %c0_4 = arith.constant 0 : index
    %4 = vector.load %arg2[%c0_3, %c0_4] : memref<368x1024xf32, #tpu.memory_space<vmem>>, vector<368x1024xf32>
    %cst_5 = arith.constant dense<0.000000e+00> : vector<2x1024xf32>
    %5 = tpu.matmul %3, %4, %cst_5 {dimension_numbers = #tpu.dot_dimension_numbers<[1], [0], [0], [1], [0, 0, 1, 1], [], []>} : vector<2x368xf32>, vector<368x1024xf32>, vector<2x1024xf32> -> vector<2x1024xf32>
    %c0_6 = arith.constant 0 : index
    %c0_7 = arith.constant 0 : index
    %6 = vector.load %arg3[%c0_6, %c0_7] : memref<1x1024xf32, #tpu.memory_space<vmem>>, vector<1x1024xf32>
    %7 = vector.broadcast %6 : vector<1x1024xf32> to vector<2x1024xf32>
    %8 = arith.addf %5, %7 : vector<2x1024xf32>
    %c0_8 = arith.constant 0 : index
    %c0_9 = arith.constant 0 : index
    %9 = vector.load %arg4[%c0_8, %c0_9] : memref<2x1024xf32, #tpu.memory_space<vmem>>, vector<2x1024xf32>
    tpu.vector_store %arg4[%c0_8, %c0_9], %8 {strides = array<i32>} : memref<2x1024xf32, #tpu.memory_space<vmem>>, vector<2x1024xf32>,
    return
  }
  func.func @transform_0(%arg0: i32) -> (i32, i32, i32) {
    %c0_i32 = arith.constant 0 : i32
    %c0_i32_0 = arith.constant 0 : i32
    %c0_i32_1 = arith.constant 0 : i32
    %c0_i32_2 = arith.constant 0 : i32
    return %c0_i32, %c0_i32_0, %c0_i32_1 : i32, i32, i32
  }
  func.func @transform_1(%arg0: i32) -> (i32, i32) {
    %c0_i32 = arith.constant 0 : i32
    %c0_i32_0 = arith.constant 0 : i32
    return %c0_i32, %arg0 : i32, i32
  }
  func.func @transform_2(%arg0: i32) -> (i32, i32) {
    %c0_i32 = arith.constant 0 : i32
    %c0_i32_0 = arith.constant 0 : i32
    return %c0_i32, %arg0 : i32, i32
  }
  func.func @transform_3(%arg0: i32) -> (i32, i32) {
    %c0_i32 = arith.constant 0 : i32
    %c0_i32_0 = arith.constant 0 : i32
    return %c0_i32, %arg0 : i32, i32
  }
}

</mosaic_0001>

<llo_original>
// kernel: tpu_custom_call.1
$region0: #{tpu_custom_call.1}
  #allocation0 [shape = 'u32[]', space=smem, size = 0x4, offset = 0x4, fixed_abs, tag = 'smem constant byte address 0x4 - core index']
  #allocation1 [shape = 'u32[144,128]{1,0:T(1,128)}', space=vmem, size = 0x12000, scoped, tag = 'internal scratch']
  %s0 = inlined_call_operand.vmem [shape: f32[2,368,49], index: 0, kind: input, shape index: {}]
  %s1 = inlined_call_operand.hbm [shape: f32[368,1024], index: 1, kind: input, shape index: {}]
  %s2 = inlined_call_operand.hbm [shape: f32[1,1024], index: 2, kind: input, shape index: {}]
  %s3 = inlined_call_operand.hbm [shape: f32[2,1024], index: 3, kind: output, shape index: {}]
  %s4 = sld [smem:[#allocation0]]
  $region30: #{tpu_custom_call.1} parent=0
    _
  %s6 = ssub.s32 1, %s4
  %s7 = scalar_select 0, %s6, %s4
  $region1: #{tpu_custom_call.1} parent=0
    #allocation2 [shape = 'u8[1507328]{0}', space=vmem, size = 0x170000, scoped, tag = 'input window, operand 1, single buffered']
    #allocation3 [shape = 's32[1]{0}', space=sflag, size = 0x4, scoped, tag = 'scoped memory for tpu_custom_call.1']
    #allocation4 [shape = 's32[1]{0}', space=sflag, size = 0x4, scoped, tag = 'scoped memory for tpu_custom_call.1']
    #allocation5 [shape = 'u8[4096]{0}', space=vmem, size = 0x1000, scoped, tag = 'input window, operand 2, single buffered']
    #allocation6 [shape = 's32[1]{0}', space=sflag, size = 0x4, scoped, tag = 'scoped memory for tpu_custom_call.1']
    #allocation7 [shape = 'u8[8192]{0}', space=vmem, size = 0x2000, scoped, tag = 'output window, operand 0, single buffered']
    %8 = vsyncpa [#allocation3], 0
    %9 = vsyncpa [#allocation6], 0
    %10 = vsyncpa [#allocation4], 0
    // Predicated region
    $region2: #{tpu_custom_call.1} parent=1 // pred_check
      _
    $region3: #{tpu_custom_call.1} parent=1 // pred_check_branch
      %12 = sbr.rel (0) target = $region5
    $region4: #{tpu_custom_call.1} parent=1 // pred_region
      _
    $region5: #{tpu_custom_call.1} parent=1 // pred_fallthru
      _
    // Predicated region
    $region6: #{tpu_custom_call.1} parent=1 // pred_check
      _
    $region7: #{tpu_custom_call.1} parent=1 // pred_check_branch
      %14 = sbr.rel (0) target = $region9
    $region8: #{tpu_custom_call.1} parent=1 // pred_region
      %s16 = ssub.s32 47104, 47104
      %17 = vsyncadd [#allocation3], %s16
      %s18 = sshll.u32 [#allocation2], 4
      %s19 = int_to_ptr.vmem [resolvable:$true] %s18
      %24 = dma.hbm_to_vmem [thread:$0]  %s1, 47104, %s19, [#allocation3], 1024, 1024, 64
    $region9: #{tpu_custom_call.1} parent=1 // pred_fallthru
      _
    // Predicated region
    $region10: #{tpu_custom_call.1} parent=1 // pred_check
      _
    $region11: #{tpu_custom_call.1} parent=1 // pred_check_branch
      %26 = sbr.rel (0) target = $region13
    $region12: #{tpu_custom_call.1} parent=1 // pred_region
      %s28 = ssub.s32 128, 128
      %29 = vsyncadd [#allocation6], %s28
      %s31 = sshll.u32 [#allocation5], 4
      %s32 = int_to_ptr.vmem [resolvable:$true] %s31
      %34 = dma.hbm_to_vmem [thread:$0]  %s2, 128, %s32, [#allocation6]
    $region13: #{tpu_custom_call.1} parent=1 // pred_fallthru
      _
    // Predicated region
    $region14: #{tpu_custom_call.1} parent=1 // pred_check
      _
    $region15: #{tpu_custom_call.1} parent=1 // pred_check_branch
      %36 = sbr.rel (0) target = $region17
    $region16: #{tpu_custom_call.1} parent=1 // pred_region
      %37 = dma.done [#allocation3], 47104
    $region17: #{tpu_custom_call.1} parent=1 // pred_fallthru
      _
    // Predicated region
    $region18: #{tpu_custom_call.1} parent=1 // pred_check
      _
    $region19: #{tpu_custom_call.1} parent=1 // pred_check_branch
      %39 = sbr.rel (0) target = $region21
    $region20: #{tpu_custom_call.1} parent=1 // pred_region
      %40 = dma.done [#allocation6], 128
    $region21: #{tpu_custom_call.1} parent=1 // pred_fallthru
      _
    %v41 = vld [vmem:[%s0] sm:$0xff]
    %v42 = vld [vmem:[%s0 + $0x8] sm:$0xff]
    %v43 = vld [vmem:[%s0 + $0x10] sm:$0xff]
    %v44 = vld [vmem:[%s0 + $0x18] sm:$0xff]
    %v45 = vld [vmem:[%s0 + $0x20] sm:$0xff]
    %v46 = vld [vmem:[%s0 + $0x28] sm:$0xff]
    %v47 = vld [vmem:[%s0 + $0x30] sm:$0xff]
    %v48 = vld [vmem:[%s0 + $0x38] sm:$0xff]
    %v49 = vld [vmem:[%s0 + $0x40] sm:$0xff]
    %v50 = vld [vmem:[%s0 + $0x48] sm:$0xff]
    %v51 = vld [vmem:[%s0 + $0x50] sm:$0xff]
    %v52 = vld [vmem:[%s0 + $0x58] sm:$0xff]
    %v53 = vld [vmem:[%s0 + $0x60] sm:$0xff]
    %v54 = vld [vmem:[%s0 + $0x68] sm:$0xff]
    %v55 = vld [vmem:[%s0 + $0x70] sm:$0xff]
    %v56 = vld [vmem:[%s0 + $0x78] sm:$0xff]
    %v57 = vld [vmem:[%s0 + $0x80] sm:$0xff]
    %v58 = vld [vmem:[%s0 + $0x88] sm:$0xff]
    %v59 = vld [vmem:[%s0 + $0x90] sm:$0xff]
    %v60 = vld [vmem:[%s0 + $0x98] sm:$0xff]
    %v61 = vld [vmem:[%s0 + $0xa0] sm:$0xff]
    %v62 = vld [vmem:[%s0 + $0xa8] sm:$0xff]
    %v63 = vld [vmem:[%s0 + $0xb0] sm:$0xff]
    %v64 = vld [vmem:[%s0 + $0xb8] sm:$0xff]
    %v65 = vld [vmem:[%s0 + $0xc0] sm:$0xff]
    %v66 = vld [vmem:[%s0 + $0xc8] sm:$0xff]
    %v67 = vld [vmem:[%s0 + $0xd0] sm:$0xff]
    %v68 = vld [vmem:[%s0 + $0xd8] sm:$0xff]
    %v69 = vld [vmem:[%s0 + $0xe0] sm:$0xff]
    %v70 = vld [vmem:[%s0 + $0xe8] sm:$0xff]
    %v71 = vld [vmem:[%s0 + $0xf0] sm:$0xff]
    %v72 = vld [vmem:[%s0 + $0xf8] sm:$0xff]
    %v73 = vld [vmem:[%s0 + $0x100] sm:$0xff]
    %v74 = vld [vmem:[%s0 + $0x108] sm:$0xff]
    %v75 = vld [vmem:[%s0 + $0x110] sm:$0xff]
    %v76 = vld [vmem:[%s0 + $0x118] sm:$0xff]
    %v77 = vld [vmem:[%s0 + $0x120] sm:$0xff]
    %v78 = vld [vmem:[%s0 + $0x128] sm:$0xff]
    %v79 = vld [vmem:[%s0 + $0x130] sm:$0xff]
    %v80 = vld [vmem:[%s0 + $0x138] sm:$0xff]
    %v81 = vld [vmem:[%s0 + $0x140] sm:$0xff]
    %v82 = vld [vmem:[%s0 + $0x148] sm:$0xff]
    %v83 = vld [vmem:[%s0 + $0x150] sm:$0xff]
    %v84 = vld [vmem:[%s0 + $0x158] sm:$0xff]
    %v85 = vld [vmem:[%s0 + $0x160] sm:$0xff]
    %v86 = vld [vmem:[%s0 + $0x168] sm:$0xff]
    %v87 = vld [vmem:[%s0 + $0x170] sm:$0xff]
    %v88 = vld [vmem:[%s0 + $0x178] sm:$0xff]
    %v89 = vld [vmem:[%s0 + $0x180] sm:$0xff]
    %v90 = vld [vmem:[%s0 + $0x188] sm:$0xff]
    %v91 = vld [vmem:[%s0 + $0x190] sm:$0xff]
    %v92 = vld [vmem:[%s0 + $0x198] sm:$0xff]
    %v93 = vld [vmem:[%s0 + $0x1a0] sm:$0xff]
    %v94 = vld [vmem:[%s0 + $0x1a8] sm:$0xff]
    %v95 = vld [vmem:[%s0 + $0x1b0] sm:$0xff]
    %v96 = vld [vmem:[%s0 + $0x1b8] sm:$0xff]
    %v97 = vld [vmem:[%s0 + $0x1c0] sm:$0xff]
    %v98 = vld [vmem:[%s0 + $0x1c8] sm:$0xff]
    %v99 = vld [vmem:[%s0 + $0x1d0] sm:$0xff]
    %v100 = vld [vmem:[%s0 + $0x1d8] sm:$0xff]
    %v101 = vld [vmem:[%s0 + $0x1e0] sm:$0xff]
    %v102 = vld [vmem:[%s0 + $0x1e8] sm:$0xff]
    %v103 = vld [vmem:[%s0 + $0x1f0] sm:$0xff]
    %v104 = vld [vmem:[%s0 + $0x1f8] sm:$0xff]
    %v105 = vld [vmem:[%s0 + $0x200] sm:$0xff]
    %v106 = vld [vmem:[%s0 + $0x208] sm:$0xff]
    %v107 = vld [vmem:[%s0 + $0x210] sm:$0xff]
    %v108 = vld [vmem:[%s0 + $0x218] sm:$0xff]
    %v109 = vld [vmem:[%s0 + $0x220] sm:$0xff]
    %v110 = vld [vmem:[%s0 + $0x228] sm:$0xff]
    %v111 = vld [vmem:[%s0 + $0x230] sm:$0xff]
    %v112 = vld [vmem:[%s0 + $0x238] sm:$0xff]
    %v113 = vld [vmem:[%s0 + $0x240] sm:$0xff]
    %v114 = vld [vmem:[%s0 + $0x248] sm:$0xff]
    %v115 = vld [vmem:[%s0 + $0x250] sm:$0xff]
    %v116 = vld [vmem:[%s0 + $0x258] sm:$0xff]
    %v117 = vld [vmem:[%s0 + $0x260] sm:$0xff]
    %v118 = vld [vmem:[%s0 + $0x268] sm:$0xff]
    %v119 = vld [vmem:[%s0 + $0x270] sm:$0xff]
    %v120 = vld [vmem:[%s0 + $0x278] sm:$0xff]
    %v121 = vld [vmem:[%s0 + $0x280] sm:$0xff]
    %v122 = vld [vmem:[%s0 + $0x288] sm:$0xff]
    %v123 = vld [vmem:[%s0 + $0x290] sm:$0xff]
    %v124 = vld [vmem:[%s0 + $0x298] sm:$0xff]
    %v125 = vld [vmem:[%s0 + $0x2a0] sm:$0xff]
    %v126 = vld [vmem:[%s0 + $0x2a8] sm:$0xff]
    %v127 = vld [vmem:[%s0 + $0x2b0] sm:$0xff]
    %v128 = vld [vmem:[%s0 + $0x2b8] sm:$0xff]
    %v129 = vld [vmem:[%s0 + $0x2c0] sm:$0xff]
    %v130 = vld [vmem:[%s0 + $0x2c8] sm:$0xff]
    %v131 = vld [vmem:[%s0 + $0x2d0] sm:$0xff]
    %v132 = vld [vmem:[%s0 + $0x2d8] sm:$0xff]
    %vm133 = vcmask 400384
    %v134 = vsel %vm133, %v41, 0.0
    %135 = vadd.xlane.f32.xlu0 %v134
    %v136 = vpop.xlane.xlu0 %135
    %v137 = vsel %vm133, %v42, 0.0
    %138 = vadd.xlane.f32.xlu0 %v137
    %v139 = vpop.xlane.xlu0 %138
    %v140 = vsel %vm133, %v43, 0.0
    %141 = vadd.xlane.f32.xlu0 %v140
    %v142 = vpop.xlane.xlu0 %141
    %v143 = vsel %vm133, %v44, 0.0
    %144 = vadd.xlane.f32.xlu0 %v143
    %v145 = vpop.xlane.xlu0 %144
    %v146 = vsel %vm133, %v45, 0.0
    %147 = vadd.xlane.f32.xlu0 %v146
    %v148 = vpop.xlane.xlu0 %147
    %v149 = vsel %vm133, %v46, 0.0
    %150 = vadd.xlane.f32.xlu0 %v149
    %v151 = vpop.xlane.xlu0 %150
    %v152 = vsel %vm133, %v47, 0.0
    %153 = vadd.xlane.f32.xlu0 %v152
    %v154 = vpop.xlane.xlu0 %153
    %v155 = vsel %vm133, %v48, 0.0
    %156 = vadd.xlane.f32.xlu0 %v155
    %v157 = vpop.xlane.xlu0 %156
    %v158 = vsel %vm133, %v49, 0.0
    %159 = vadd.xlane.f32.xlu0 %v158
    %v160 = vpop.xlane.xlu0 %159
    %v161 = vsel %vm133, %v50, 0.0
    %162 = vadd.xlane.f32.xlu0 %v161
    %v163 = vpop.xlane.xlu0 %162
    %v164 = vsel %vm133, %v51, 0.0
    %165 = vadd.xlane.f32.xlu0 %v164
    %v166 = vpop.xlane.xlu0 %165
    %v167 = vsel %vm133, %v52, 0.0
    %168 = vadd.xlane.f32.xlu0 %v167
    %v169 = vpop.xlane.xlu0 %168
    %v170 = vsel %vm133, %v53, 0.0
    %171 = vadd.xlane.f32.xlu0 %v170
    %v172 = vpop.xlane.xlu0 %171
    %v173 = vsel %vm133, %v54, 0.0
    %174 = vadd.xlane.f32.xlu0 %v173
    %v175 = vpop.xlane.xlu0 %174
    %v176 = vsel %vm133, %v55, 0.0
    %177 = vadd.xlane.f32.xlu0 %v176
    %v178 = vpop.xlane.xlu0 %177
    %v179 = vsel %vm133, %v56, 0.0
    %180 = vadd.xlane.f32.xlu0 %v179
    %v181 = vpop.xlane.xlu0 %180
    %v182 = vsel %vm133, %v57, 0.0
    %183 = vadd.xlane.f32.xlu0 %v182
    %v184 = vpop.xlane.xlu0 %183
    %v185 = vsel %vm133, %v58, 0.0
    %186 = vadd.xlane.f32.xlu0 %v185
    %v187 = vpop.xlane.xlu0 %186
    %v188 = vsel %vm133, %v59, 0.0
    %189 = vadd.xlane.f32.xlu0 %v188
    %v190 = vpop.xlane.xlu0 %189
    %v191 = vsel %vm133, %v60, 0.0
    %192 = vadd.xlane.f32.xlu0 %v191
    %v193 = vpop.xlane.xlu0 %192
    %v194 = vsel %vm133, %v61, 0.0
    %195 = vadd.xlane.f32.xlu0 %v194
    %v196 = vpop.xlane.xlu0 %195
    %v197 = vsel %vm133, %v62, 0.0
    %198 = vadd.xlane.f32.xlu0 %v197
    %v199 = vpop.xlane.xlu0 %198
    %v200 = vsel %vm133, %v63, 0.0
    %201 = vadd.xlane.f32.xlu0 %v200
    %v202 = vpop.xlane.xlu0 %201
    %v203 = vsel %vm133, %v64, 0.0
    %204 = vadd.xlane.f32.xlu0 %v203
    %v205 = vpop.xlane.xlu0 %204
    %v206 = vsel %vm133, %v65, 0.0
    %207 = vadd.xlane.f32.xlu0 %v206
    %v208 = vpop.xlane.xlu0 %207
    %v209 = vsel %vm133, %v66, 0.0
    %210 = vadd.xlane.f32.xlu0 %v209
    %v211 = vpop.xlane.xlu0 %210
    %v212 = vsel %vm133, %v67, 0.0
    %213 = vadd.xlane.f32.xlu0 %v212
    %v214 = vpop.xlane.xlu0 %213
    %v215 = vsel %vm133, %v68, 0.0
    %216 = vadd.xlane.f32.xlu0 %v215
    %v217 = vpop.xlane.xlu0 %216
    %v218 = vsel %vm133, %v69, 0.0
    %219 = vadd.xlane.f32.xlu0 %v218
    %v220 = vpop.xlane.xlu0 %219
    %v221 = vsel %vm133, %v70, 0.0
    %222 = vadd.xlane.f32.xlu0 %v221
    %v223 = vpop.xlane.xlu0 %222
    %v224 = vsel %vm133, %v71, 0.0
    %225 = vadd.xlane.f32.xlu0 %v224
    %v226 = vpop.xlane.xlu0 %225
    %v227 = vsel %vm133, %v72, 0.0
    %228 = vadd.xlane.f32.xlu0 %v227
    %v229 = vpop.xlane.xlu0 %228
    %v230 = vsel %vm133, %v73, 0.0
    %231 = vadd.xlane.f32.xlu0 %v230
    %v232 = vpop.xlane.xlu0 %231
    %v233 = vsel %vm133, %v74, 0.0
    %234 = vadd.xlane.f32.xlu0 %v233
    %v235 = vpop.xlane.xlu0 %234
    %v236 = vsel %vm133, %v75, 0.0
    %237 = vadd.xlane.f32.xlu0 %v236
    %v238 = vpop.xlane.xlu0 %237
    %v239 = vsel %vm133, %v76, 0.0
    %240 = vadd.xlane.f32.xlu0 %v239
    %v241 = vpop.xlane.xlu0 %240
    %v242 = vsel %vm133, %v77, 0.0
    %243 = vadd.xlane.f32.xlu0 %v242
    %v244 = vpop.xlane.xlu0 %243
    %v245 = vsel %vm133, %v78, 0.0
    %246 = vadd.xlane.f32.xlu0 %v245
    %v247 = vpop.xlane.xlu0 %246
    %v248 = vsel %vm133, %v79, 0.0
    %249 = vadd.xlane.f32.xlu0 %v248
    %v250 = vpop.xlane.xlu0 %249
    %v251 = vsel %vm133, %v80, 0.0
    %252 = vadd.xlane.f32.xlu0 %v251
    %v253 = vpop.xlane.xlu0 %252
    %v254 = vsel %vm133, %v81, 0.0
    %255 = vadd.xlane.f32.xlu0 %v254
    %v256 = vpop.xlane.xlu0 %255
    %v257 = vsel %vm133, %v82, 0.0
    %258 = vadd.xlane.f32.xlu0 %v257
    %v259 = vpop.xlane.xlu0 %258
    %v260 = vsel %vm133, %v83, 0.0
    %261 = vadd.xlane.f32.xlu0 %v260
    %v262 = vpop.xlane.xlu0 %261
    %v263 = vsel %vm133, %v84, 0.0
    %264 = vadd.xlane.f32.xlu0 %v263
    %v265 = vpop.xlane.xlu0 %264
    %v266 = vsel %vm133, %v85, 0.0
    %267 = vadd.xlane.f32.xlu0 %v266
    %v268 = vpop.xlane.xlu0 %267
    %v269 = vsel %vm133, %v86, 0.0
    %270 = vadd.xlane.f32.xlu0 %v269
    %v271 = vpop.xlane.xlu0 %270
    %v272 = vsel %vm133, %v87, 0.0
    %273 = vadd.xlane.f32.xlu0 %v272
    %v274 = vpop.xlane.xlu0 %273
    %v275 = vsel %vm133, %v88, 0.0
    %276 = vadd.xlane.f32.xlu0 %v275
    %v277 = vpop.xlane.xlu0 %276
    %v278 = vsel %vm133, %v89, 0.0
    %279 = vadd.xlane.f32.xlu0 %v278
    %v280 = vpop.xlane.xlu0 %279
    %v281 = vsel %vm133, %v90, 0.0
    %282 = vadd.xlane.f32.xlu0 %v281
    %v283 = vpop.xlane.xlu0 %282
    %v284 = vsel %vm133, %v91, 0.0
    %285 = vadd.xlane.f32.xlu0 %v284
    %v286 = vpop.xlane.xlu0 %285
    %v287 = vsel %vm133, %v92, 0.0
    %288 = vadd.xlane.f32.xlu0 %v287
    %v289 = vpop.xlane.xlu0 %288
    %v290 = vsel %vm133, %v93, 0.0
    %291 = vadd.xlane.f32.xlu0 %v290
    %v292 = vpop.xlane.xlu0 %291
    %v293 = vsel %vm133, %v94, 0.0
    %294 = vadd.xlane.f32.xlu0 %v293
    %v295 = vpop.xlane.xlu0 %294
    %v296 = vsel %vm133, %v95, 0.0
    %297 = vadd.xlane.f32.xlu0 %v296
    %v298 = vpop.xlane.xlu0 %297
    %v299 = vsel %vm133, %v96, 0.0
    %300 = vadd.xlane.f32.xlu0 %v299
    %v301 = vpop.xlane.xlu0 %300
    %v302 = vsel %vm133, %v97, 0.0
    %303 = vadd.xlane.f32.xlu0 %v302
    %v304 = vpop.xlane.xlu0 %303
    %v305 = vsel %vm133, %v98, 0.0
    %306 = vadd.xlane.f32.xlu0 %v305
    %v307 = vpop.xlane.xlu0 %306
    %v308 = vsel %vm133, %v99, 0.0
    %309 = vadd.xlane.f32.xlu0 %v308
    %v310 = vpop.xlane.xlu0 %309
    %v311 = vsel %vm133, %v100, 0.0
    %312 = vadd.xlane.f32.xlu0 %v311
    %v313 = vpop.xlane.xlu0 %312
    %v314 = vsel %vm133, %v101, 0.0
    %315 = vadd.xlane.f32.xlu0 %v314
    %v316 = vpop.xlane.xlu0 %315
    %v317 = vsel %vm133, %v102, 0.0
    %318 = vadd.xlane.f32.xlu0 %v317
    %v319 = vpop.xlane.xlu0 %318
    %v320 = vsel %vm133, %v103, 0.0
    %321 = vadd.xlane.f32.xlu0 %v320
    %v322 = vpop.xlane.xlu0 %321
    %v323 = vsel %vm133, %v104, 0.0
    %324 = vadd.xlane.f32.xlu0 %v323
    %v325 = vpop.xlane.xlu0 %324
    %v326 = vsel %vm133, %v105, 0.0
    %327 = vadd.xlane.f32.xlu0 %v326
    %v328 = vpop.xlane.xlu0 %327
    %v329 = vsel %vm133, %v106, 0.0
    %330 = vadd.xlane.f32.xlu0 %v329
    %v331 = vpop.xlane.xlu0 %330
    %v332 = vsel %vm133, %v107, 0.0
    %333 = vadd.xlane.f32.xlu0 %v332
    %v334 = vpop.xlane.xlu0 %333
    %v335 = vsel %vm133, %v108, 0.0
    %336 = vadd.xlane.f32.xlu0 %v335
    %v337 = vpop.xlane.xlu0 %336
    %v338 = vsel %vm133, %v109, 0.0
    %339 = vadd.xlane.f32.xlu0 %v338
    %v340 = vpop.xlane.xlu0 %339
    %v341 = vsel %vm133, %v110, 0.0
    %342 = vadd.xlane.f32.xlu0 %v341
    %v343 = vpop.xlane.xlu0 %342
    %v344 = vsel %vm133, %v111, 0.0
    %345 = vadd.xlane.f32.xlu0 %v344
    %v346 = vpop.xlane.xlu0 %345
    %v347 = vsel %vm133, %v112, 0.0
    %348 = vadd.xlane.f32.xlu0 %v347
    %v349 = vpop.xlane.xlu0 %348
    %v350 = vsel %vm133, %v113, 0.0
    %351 = vadd.xlane.f32.xlu0 %v350
    %v352 = vpop.xlane.xlu0 %351
    %v353 = vsel %vm133, %v114, 0.0
    %354 = vadd.xlane.f32.xlu0 %v353
    %v355 = vpop.xlane.xlu0 %354
    %v356 = vsel %vm133, %v115, 0.0
    %357 = vadd.xlane.f32.xlu0 %v356
    %v358 = vpop.xlane.xlu0 %357
    %v359 = vsel %vm133, %v116, 0.0
    %360 = vadd.xlane.f32.xlu0 %v359
    %v361 = vpop.xlane.xlu0 %360
    %v362 = vsel %vm133, %v117, 0.0
    %363 = vadd.xlane.f32.xlu0 %v362
    %v364 = vpop.xlane.xlu0 %363
    %v365 = vsel %vm133, %v118, 0.0
    %366 = vadd.xlane.f32.xlu0 %v365
    %v367 = vpop.xlane.xlu0 %366
    %v368 = vsel %vm133, %v119, 0.0
    %369 = vadd.xlane.f32.xlu0 %v368
    %v370 = vpop.xlane.xlu0 %369
    %v371 = vsel %vm133, %v120, 0.0
    %372 = vadd.xlane.f32.xlu0 %v371
    %v373 = vpop.xlane.xlu0 %372
    %v374 = vsel %vm133, %v121, 0.0
    %375 = vadd.xlane.f32.xlu0 %v374
    %v376 = vpop.xlane.xlu0 %375
    %v377 = vsel %vm133, %v122, 0.0
    %378 = vadd.xlane.f32.xlu0 %v377
    %v379 = vpop.xlane.xlu0 %378
    %v380 = vsel %vm133, %v123, 0.0
    %381 = vadd.xlane.f32.xlu0 %v380
    %v382 = vpop.xlane.xlu0 %381
    %v383 = vsel %vm133, %v124, 0.0
    %384 = vadd.xlane.f32.xlu0 %v383
    %v385 = vpop.xlane.xlu0 %384
    %v386 = vsel %vm133, %v125, 0.0
    %387 = vadd.xlane.f32.xlu0 %v386
    %v388 = vpop.xlane.xlu0 %387
    %v389 = vsel %vm133, %v126, 0.0
    %390 = vadd.xlane.f32.xlu0 %v389
    %v391 = vpop.xlane.xlu0 %390
    %v392 = vsel %vm133, %v127, 0.0
    %393 = vadd.xlane.f32.xlu0 %v392
    %v394 = vpop.xlane.xlu0 %393
    %v395 = vsel %vm133, %v128, 0.0
    %396 = vadd.xlane.f32.xlu0 %v395
    %v397 = vpop.xlane.xlu0 %396
    %v398 = vsel %vm133, %v129, 0.0
    %399 = vadd.xlane.f32.xlu0 %v398
    %v400 = vpop.xlane.xlu0 %399
    %v401 = vsel %vm133, %v130, 0.0
    %402 = vadd.xlane.f32.xlu0 %v401
    %v403 = vpop.xlane.xlu0 %402
    %v404 = vsel %vm133, %v131, 0.0
    %405 = vadd.xlane.f32.xlu0 %v404
    %v406 = vpop.xlane.xlu0 %405
    %v407 = vsel %vm133, %v132, 0.0
    %408 = vadd.xlane.f32.xlu0 %v407
    %v409 = vpop.xlane.xlu0 %408
    %v410 = vmul.f32 %v136, 0.020408163
    %v411 = vmul.f32 %v139, 0.020408163
    %v412 = vmul.f32 %v142, 0.020408163
    %v413 = vmul.f32 %v145, 0.020408163
    %v414 = vmul.f32 %v148, 0.020408163
    %v415 = vmul.f32 %v151, 0.020408163
    %v416 = vmul.f32 %v154, 0.020408163
    %v417 = vmul.f32 %v157, 0.020408163
    %v418 = vmul.f32 %v160, 0.020408163
    %v419 = vmul.f32 %v163, 0.020408163
    %v420 = vmul.f32 %v166, 0.020408163
    %v421 = vmul.f32 %v169, 0.020408163
    %v422 = vmul.f32 %v172, 0.020408163
    %v423 = vmul.f32 %v175, 0.020408163
    %v424 = vmul.f32 %v178, 0.020408163
    %v425 = vmul.f32 %v181, 0.020408163
    %v426 = vmul.f32 %v184, 0.020408163
    %v427 = vmul.f32 %v187, 0.020408163
    %v428 = vmul.f32 %v190, 0.020408163
    %v429 = vmul.f32 %v193, 0.020408163
    %v430 = vmul.f32 %v196, 0.020408163
    %v431 = vmul.f32 %v199, 0.020408163
    %v432 = vmul.f32 %v202, 0.020408163
    %v433 = vmul.f32 %v205, 0.020408163
    %v434 = vmul.f32 %v208, 0.020408163
    %v435 = vmul.f32 %v211, 0.020408163
    %v436 = vmul.f32 %v214, 0.020408163
    %v437 = vmul.f32 %v217, 0.020408163
    %v438 = vmul.f32 %v220, 0.020408163
    %v439 = vmul.f32 %v223, 0.020408163
    %v440 = vmul.f32 %v226, 0.020408163
    %v441 = vmul.f32 %v229, 0.020408163
    %v442 = vmul.f32 %v232, 0.020408163
    %v443 = vmul.f32 %v235, 0.020408163
    %v444 = vmul.f32 %v238, 0.020408163
    %v445 = vmul.f32 %v241, 0.020408163
    %v446 = vmul.f32 %v244, 0.020408163
    %v447 = vmul.f32 %v247, 0.020408163
    %v448 = vmul.f32 %v250, 0.020408163
    %v449 = vmul.f32 %v253, 0.020408163
    %v450 = vmul.f32 %v256, 0.020408163
    %v451 = vmul.f32 %v259, 0.020408163
    %v452 = vmul.f32 %v262, 0.020408163
    %v453 = vmul.f32 %v265, 0.020408163
    %v454 = vmul.f32 %v268, 0.020408163
    %v455 = vmul.f32 %v271, 0.020408163
    %v456 = vmul.f32 %v274, 0.020408163
    %v457 = vmul.f32 %v277, 0.020408163
    %v458 = vmul.f32 %v280, 0.020408163
    %v459 = vmul.f32 %v283, 0.020408163
    %v460 = vmul.f32 %v286, 0.020408163
    %v461 = vmul.f32 %v289, 0.020408163
    %v462 = vmul.f32 %v292, 0.020408163
    %v463 = vmul.f32 %v295, 0.020408163
    %v464 = vmul.f32 %v298, 0.020408163
    %v465 = vmul.f32 %v301, 0.020408163
    %v466 = vmul.f32 %v304, 0.020408163
    %v467 = vmul.f32 %v307, 0.020408163
    %v468 = vmul.f32 %v310, 0.020408163
    %v469 = vmul.f32 %v313, 0.020408163
    %v470 = vmul.f32 %v316, 0.020408163
    %v471 = vmul.f32 %v319, 0.020408163
    %v472 = vmul.f32 %v322, 0.020408163
    %v473 = vmul.f32 %v325, 0.020408163
    %v474 = vmul.f32 %v328, 0.020408163
    %v475 = vmul.f32 %v331, 0.020408163
    %v476 = vmul.f32 %v334, 0.020408163
    %v477 = vmul.f32 %v337, 0.020408163
    %v478 = vmul.f32 %v340, 0.020408163
    %v479 = vmul.f32 %v343, 0.020408163
    %v480 = vmul.f32 %v346, 0.020408163
    %v481 = vmul.f32 %v349, 0.020408163
    %v482 = vmul.f32 %v352, 0.020408163
    %v483 = vmul.f32 %v355, 0.020408163
    %v484 = vmul.f32 %v358, 0.020408163
    %v485 = vmul.f32 %v361, 0.020408163
    %v486 = vmul.f32 %v364, 0.020408163
    %v487 = vmul.f32 %v367, 0.020408163
    %v488 = vmul.f32 %v370, 0.020408163
    %v489 = vmul.f32 %v373, 0.020408163
    %v490 = vmul.f32 %v376, 0.020408163
    %v491 = vmul.f32 %v379, 0.020408163
    %v492 = vmul.f32 %v382, 0.020408163
    %v493 = vmul.f32 %v385, 0.020408163
    %v494 = vmul.f32 %v388, 0.020408163
    %v495 = vmul.f32 %v391, 0.020408163
    %v496 = vmul.f32 %v394, 0.020408163
    %v497 = vmul.f32 %v397, 0.020408163
    %v498 = vmul.f32 %v400, 0.020408163
    %v499 = vmul.f32 %v403, 0.020408163
    %v500 = vmul.f32 %v406, 0.020408163
    %v501 = vmul.f32 %v409, 0.020408163
    %v502 = vld [vmem:[#allocation2] sm:$0xff]
    %v503 = vld [vmem:[#allocation2 + $0x8] sm:$0xff]
    %v504 = vld [vmem:[#allocation2 + $0x10] sm:$0xff]
    %v505 = vld [vmem:[#allocation2 + $0x18] sm:$0xff]
    %v506 = vld [vmem:[#allocation2 + $0x20] sm:$0xff]
    %v507 = vld [vmem:[#allocation2 + $0x28] sm:$0xff]
    %v508 = vld [vmem:[#allocation2 + $0x30] sm:$0xff]
    %v509 = vld [vmem:[#allocation2 + $0x38] sm:$0xff]
    %v510 = vld [vmem:[#allocation2 + $0x40] sm:$0xff]
    %v511 = vld [vmem:[#allocation2 + $0x48] sm:$0xff]
    %v512 = vld [vmem:[#allocation2 + $0x50] sm:$0xff]
    %v513 = vld [vmem:[#allocation2 + $0x58] sm:$0xff]
    %v514 = vld [vmem:[#allocation2 + $0x60] sm:$0xff]
    %v515 = vld [vmem:[#allocation2 + $0x68] sm:$0xff]
    %v516 = vld [vmem:[#allocation2 + $0x70] sm:$0xff]
    %v517 = vld [vmem:[#allocation2 + $0x78] sm:$0xff]
    %v518 = vld [vmem:[#allocation2 + $0x80] sm:$0xff]
    %v519 = vld [vmem:[#allocation2 + $0x88] sm:$0xff]
    %v520 = vld [vmem:[#allocation2 + $0x90] sm:$0xff]
    %v521 = vld [vmem:[#allocation2 + $0x98] sm:$0xff]
    %v522 = vld [vmem:[#allocation2 + $0xa0] sm:$0xff]
    %v523 = vld [vmem:[#allocation2 + $0xa8] sm:$0xff]
    %v524 = vld [vmem:[#allocation2 + $0xb0] sm:$0xff]
    %v525 = vld [vmem:[#allocation2 + $0xb8] sm:$0xff]
    %v526 = vld [vmem:[#allocation2 + $0xc0] sm:$0xff]
    %v527 = vld [vmem:[#allocation2 + $0xc8] sm:$0xff]
    %v528 = vld [vmem:[#allocation2 + $0xd0] sm:$0xff]
    %v529 = vld [vmem:[#allocation2 + $0xd8] sm:$0xff]
    %v530 = vld [vmem:[#allocation2 + $0xe0] sm:$0xff]
    %v531 = vld [vmem:[#allocation2 + $0xe8] sm:$0xff]
    %v532 = vld [vmem:[#allocation2 + $0xf0] sm:$0xff]
    %v533 = vld [vmem:[#allocation2 + $0xf8] sm:$0xff]
    %v534 = vld [vmem:[#allocation2 + $0x100] sm:$0xff]
    %v535 = vld [vmem:[#allocation2 + $0x108] sm:$0xff]
    %v536 = vld [vmem:[#allocation2 + $0x110] sm:$0xff]
    %v537 = vld [vmem:[#allocation2 + $0x118] sm:$0xff]
    %v538 = vld [vmem:[#allocation2 + $0x120] sm:$0xff]
    %v539 = vld [vmem:[#allocation2 + $0x128] sm:$0xff]
    %v540 = vld [vmem:[#allocation2 + $0x130] sm:$0xff]
    %v541 = vld [vmem:[#allocation2 + $0x138] sm:$0xff]
    %v542 = vld [vmem:[#allocation2 + $0x140] sm:$0xff]
    %v543 = vld [vmem:[#allocation2 + $0x148] sm:$0xff]
    %v544 = vld [vmem:[#allocation2 + $0x150] sm:$0xff]
    %v545 = vld [vmem:[#allocation2 + $0x158] sm:$0xff]
    %v546 = vld [vmem:[#allocation2 + $0x160] sm:$0xff]
    %v547 = vld [vmem:[#allocation2 + $0x168] sm:$0xff]
    %v548 = vld [vmem:[#allocation2 + $0x170] sm:$0xff]
    %v549 = vld [vmem:[#allocation2 + $0x178] sm:$0xff]
    %v550 = vld [vmem:[#allocation2 + $0x180] sm:$0xff]
    %v551 = vld [vmem:[#allocation2 + $0x188] sm:$0xff]
    %v552 = vld [vmem:[#allocation2 + $0x190] sm:$0xff]
    %v553 = vld [vmem:[#allocation2 + $0x198] sm:$0xff]
    %v554 = vld [vmem:[#allocation2 + $0x1a0] sm:$0xff]
    %v555 = vld [vmem:[#allocation2 + $0x1a8] sm:$0xff]
    %v556 = vld [vmem:[#allocation2 + $0x1b0] sm:$0xff]
    %v557 = vld [vmem:[#allocation2 + $0x1b8] sm:$0xff]
    %v558 = vld [vmem:[#allocation2 + $0x1c0] sm:$0xff]
    %v559 = vld [vmem:[#allocation2 + $0x1c8] sm:$0xff]
    %v560 = vld [vmem:[#allocation2 + $0x1d0] sm:$0xff]
    %v561 = vld [vmem:[#allocation2 + $0x1d8] sm:$0xff]
    %v562 = vld [vmem:[#allocation2 + $0x1e0] sm:$0xff]
    %v563 = vld [vmem:[#allocation2 + $0x1e8] sm:$0xff]
    %v564 = vld [vmem:[#allocation2 + $0x1f0] sm:$0xff]
    %v565 = vld [vmem:[#allocation2 + $0x1f8] sm:$0xff]
    %v566 = vld [vmem:[#allocation2 + $0x200] sm:$0xff]
    %v567 = vld [vmem:[#allocation2 + $0x208] sm:$0xff]
    %v568 = vld [vmem:[#allocation2 + $0x210] sm:$0xff]
    %v569 = vld [vmem:[#allocation2 + $0x218] sm:$0xff]
    %v570 = vld [vmem:[#allocation2 + $0x220] sm:$0xff]
    %v571 = vld [vmem:[#allocation2 + $0x228] sm:$0xff]
    %v572 = vld [vmem:[#allocation2 + $0x230] sm:$0xff]
    %v573 = vld [vmem:[#allocation2 + $0x238] sm:$0xff]
    %v574 = vld [vmem:[#allocation2 + $0x240] sm:$0xff]
    %v575 = vld [vmem:[#allocation2 + $0x248] sm:$0xff]
    %v576 = vld [vmem:[#allocation2 + $0x250] sm:$0xff]
    %v577 = vld [vmem:[#allocation2 + $0x258] sm:$0xff]
    %v578 = vld [vmem:[#allocation2 + $0x260] sm:$0xff]
    %v579 = vld [vmem:[#allocation2 + $0x268] sm:$0xff]
    %v580 = vld [vmem:[#allocation2 + $0x270] sm:$0xff]
    %v581 = vld [vmem:[#allocation2 + $0x278] sm:$0xff]
    %v582 = vld [vmem:[#allocation2 + $0x280] sm:$0xff]
    %v583 = vld [vmem:[#allocation2 + $0x288] sm:$0xff]
    %v584 = vld [vmem:[#allocation2 + $0x290] sm:$0xff]
    %v585 = vld [vmem:[#allocation2 + $0x298] sm:$0xff]
    %v586 = vld [vmem:[#allocation2 + $0x2a0] sm:$0xff]
    %v587 = vld [vmem:[#allocation2 + $0x2a8] sm:$0xff]
    %v588 = vld [vmem:[#allocation2 + $0x2b0] sm:$0xff]
    %v589 = vld [vmem:[#allocation2 + $0x2b8] sm:$0xff]
    %v590 = vld [vmem:[#allocation2 + $0x2c0] sm:$0xff]
    %v591 = vld [vmem:[#allocation2 + $0x2c8] sm:$0xff]
    %v592 = vld [vmem:[#allocation2 + $0x2d0] sm:$0xff]
    %v593 = vld [vmem:[#allocation2 + $0x2d8] sm:$0xff]
    %v594 = vld [vmem:[#allocation2 + $0x2e0] sm:$0xff]
    %v595 = vld [vmem:[#allocation2 + $0x2e8] sm:$0xff]
    %v596 = vld [vmem:[#allocation2 + $0x2f0] sm:$0xff]
    %v597 = vld [vmem:[#allocation2 + $0x2f8] sm:$0xff]
    %v598 = vld [vmem:[#allocation2 + $0x300] sm:$0xff]
    %v599 = vld [vmem:[#allocation2 + $0x308] sm:$0xff]
    %v600 = vld [vmem:[#allocation2 + $0x310] sm:$0xff]
    %v601 = vld [vmem:[#allocation2 + $0x318] sm:$0xff]
    %v602 = vld [vmem:[#allocation2 + $0x320] sm:$0xff]
    %v603 = vld [vmem:[#allocation2 + $0x328] sm:$0xff]
    %v604 = vld [vmem:[#allocation2 + $0x330] sm:$0xff]
    %v605 = vld [vmem:[#allocation2 + $0x338] sm:$0xff]
    %v606 = vld [vmem:[#allocation2 + $0x340] sm:$0xff]
    %v607 = vld [vmem:[#allocation2 + $0x348] sm:$0xff]
    %v608 = vld [vmem:[#allocation2 + $0x350] sm:$0xff]
    %v609 = vld [vmem:[#allocation2 + $0x358] sm:$0xff]
    %v610 = vld [vmem:[#allocation2 + $0x360] sm:$0xff]
    %v611 = vld [vmem:[#allocation2 + $0x368] sm:$0xff]
    %v612 = vld [vmem:[#allocation2 + $0x370] sm:$0xff]
    %v613 = vld [vmem:[#allocation2 + $0x378] sm:$0xff]
    %v614 = vld [vmem:[#allocation2 + $0x380] sm:$0xff]
    %v615 = vld [vmem:[#allocation2 + $0x388] sm:$0xff]
    %v616 = vld [vmem:[#allocation2 + $0x390] sm:$0xff]
    %v617 = vld [vmem:[#allocation2 + $0x398] sm:$0xff]
    %v618 = vld [vmem:[#allocation2 + $0x3a0] sm:$0xff]
    %v619 = vld [vmem:[#allocation2 + $0x3a8] sm:$0xff]
    %v620 = vld [vmem:[#allocation2 + $0x3b0] sm:$0xff]
    %v621 = vld [vmem:[#allocation2 + $0x3b8] sm:$0xff]
    %v622 = vld [vmem:[#allocation2 + $0x3c0] sm:$0xff]
    %v623 = vld [vmem:[#allocation2 + $0x3c8] sm:$0xff]
    %v624 = vld [vmem:[#allocation2 + $0x3d0] sm:$0xff]
    %v625 = vld [vmem:[#allocation2 + $0x3d8] sm:$0xff]
    %v626 = vld [vmem:[#allocation2 + $0x3e0] sm:$0xff]
    %v627 = vld [vmem:[#allocation2 + $0x3e8] sm:$0xff]
    %v628 = vld [vmem:[#allocation2 + $0x3f0] sm:$0xff]
    %v629 = vld [vmem:[#allocation2 + $0x3f8] sm:$0xff]
    %v630 = vld [vmem:[#allocation2 + $0x400] sm:$0xff]
    %v631 = vld [vmem:[#allocation2 + $0x408] sm:$0xff]
    %v632 = vld [vmem:[#allocation2 + $0x410] sm:$0xff]
    %v633 = vld [vmem:[#allocation2 + $0x418] sm:$0xff]
    %v634 = vld [vmem:[#allocation2 + $0x420] sm:$0xff]
    %v635 = vld [vmem:[#allocation2 + $0x428] sm:$0xff]
    %v636 = vld [vmem:[#allocation2 + $0x430] sm:$0xff]
    %v637 = vld [vmem:[#allocation2 + $0x438] sm:$0xff]
    %v638 = vld [vmem:[#allocation2 + $0x440] sm:$0xff]
    %v639 = vld [vmem:[#allocation2 + $0x448] sm:$0xff]
    %v640 = vld [vmem:[#allocation2 + $0x450] sm:$0xff]
    %v641 = vld [vmem:[#allocation2 + $0x458] sm:$0xff]
    %v642 = vld [vmem:[#allocation2 + $0x460] sm:$0xff]
    %v643 = vld [vmem:[#allocation2 + $0x468] sm:$0xff]
    %v644 = vld [vmem:[#allocation2 + $0x470] sm:$0xff]
    %v645 = vld [vmem:[#allocation2 + $0x478] sm:$0xff]
    %v646 = vld [vmem:[#allocation2 + $0x480] sm:$0xff]
    %v647 = vld [vmem:[#allocation2 + $0x488] sm:$0xff]
    %v648 = vld [vmem:[#allocation2 + $0x490] sm:$0xff]
    %v649 = vld [vmem:[#allocation2 + $0x498] sm:$0xff]
    %v650 = vld [vmem:[#allocation2 + $0x4a0] sm:$0xff]
    %v651 = vld [vmem:[#allocation2 + $0x4a8] sm:$0xff]
    %v652 = vld [vmem:[#allocation2 + $0x4b0] sm:$0xff]
    %v653 = vld [vmem:[#allocation2 + $0x4b8] sm:$0xff]
    %v654 = vld [vmem:[#allocation2 + $0x4c0] sm:$0xff]
    %v655 = vld [vmem:[#allocation2 + $0x4c8] sm:$0xff]
    %v656 = vld [vmem:[#allocation2 + $0x4d0] sm:$0xff]
    %v657 = vld [vmem:[#allocation2 + $0x4d8] sm:$0xff]
    %v658 = vld [vmem:[#allocation2 + $0x4e0] sm:$0xff]
    %v659 = vld [vmem:[#allocation2 + $0x4e8] sm:$0xff]
    %v660 = vld [vmem:[#allocation2 + $0x4f0] sm:$0xff]
    %v661 = vld [vmem:[#allocation2 + $0x4f8] sm:$0xff]
    %v662 = vld [vmem:[#allocation2 + $0x500] sm:$0xff]
    %v663 = vld [vmem:[#allocation2 + $0x508] sm:$0xff]
    %v664 = vld [vmem:[#allocation2 + $0x510] sm:$0xff]
    %v665 = vld [vmem:[#allocation2 + $0x518] sm:$0xff]
    %v666 = vld [vmem:[#allocation2 + $0x520] sm:$0xff]
    %v667 = vld [vmem:[#allocation2 + $0x528] sm:$0xff]
    %v668 = vld [vmem:[#allocation2 + $0x530] sm:$0xff]
    %v669 = vld [vmem:[#allocation2 + $0x538] sm:$0xff]
    %v670 = vld [vmem:[#allocation2 + $0x540] sm:$0xff]
    %v671 = vld [vmem:[#allocation2 + $0x548] sm:$0xff]
    %v672 = vld [vmem:[#allocation2 + $0x550] sm:$0xff]
    %v673 = vld [vmem:[#allocation2 + $0x558] sm:$0xff]
    %v674 = vld [vmem:[#allocation2 + $0x560] sm:$0xff]
    %v675 = vld [vmem:[#allocation2 + $0x568] sm:$0xff]
    %v676 = vld [vmem:[#allocation2 + $0x570] sm:$0xff]
    %v677 = vld [vmem:[#allocation2 + $0x578] sm:$0xff]
    %v678 = vld [vmem:[#allocation2 + $0x580] sm:$0xff]
    %v679 = vld [vmem:[#allocation2 + $0x588] sm:$0xff]
    %v680 = vld [vmem:[#allocation2 + $0x590] sm:$0xff]
    %v681 = vld [vmem:[#allocation2 + $0x598] sm:$0xff]
    %v682 = vld [vmem:[#allocation2 + $0x5a0] sm:$0xff]
    %v683 = vld [vmem:[#allocation2 + $0x5a8] sm:$0xff]
    %v684 = vld [vmem:[#allocation2 + $0x5b0] sm:$0xff]
    %v685 = vld [vmem:[#allocation2 + $0x5b8] sm:$0xff]
    %v686 = vld [vmem:[#allocation2 + $0x5c0] sm:$0xff]
    %v687 = vld [vmem:[#allocation2 + $0x5c8] sm:$0xff]
    %v688 = vld [vmem:[#allocation2 + $0x5d0] sm:$0xff]
    %v689 = vld [vmem:[#allocation2 + $0x5d8] sm:$0xff]
    %v690 = vld [vmem:[#allocation2 + $0x5e0] sm:$0xff]
    %v691 = vld [vmem:[#allocation2 + $0x5e8] sm:$0xff]
    %v692 = vld [vmem:[#allocation2 + $0x5f0] sm:$0xff]
    %v693 = vld [vmem:[#allocation2 + $0x5f8] sm:$0xff]
    %v694 = vld [vmem:[#allocation2 + $0x600] sm:$0xff]
    %v695 = vld [vmem:[#allocation2 + $0x608] sm:$0xff]
    %v696 = vld [vmem:[#allocation2 + $0x610] sm:$0xff]
    %v697 = vld [vmem:[#allocation2 + $0x618] sm:$0xff]
    %v698 = vld [vmem:[#allocation2 + $0x620] sm:$0xff]
    %v699 = vld [vmem:[#allocation2 + $0x628] sm:$0xff]
    %v700 = vld [vmem:[#allocation2 + $0x630] sm:$0xff]
    %v701 = vld [vmem:[#allocation2 + $0x638] sm:$0xff]
    %v702 = vld [vmem:[#allocation2 + $0x640] sm:$0xff]
    %v703 = vld [vmem:[#allocation2 + $0x648] sm:$0xff]
    %v704 = vld [vmem:[#allocation2 + $0x650] sm:$0xff]
    %v705 = vld [vmem:[#allocation2 + $0x658] sm:$0xff]
    %v706 = vld [vmem:[#allocation2 + $0x660] sm:$0xff]
    %v707 = vld [vmem:[#allocation2 + $0x668] sm:$0xff]
    %v708 = vld [vmem:[#allocation2 + $0x670] sm:$0xff]
    %v709 = vld [vmem:[#allocation2 + $0x678] sm:$0xff]
    %v710 = vld [vmem:[#allocation2 + $0x680] sm:$0xff]
    %v711 = vld [vmem:[#allocation2 + $0x688] sm:$0xff]
    %v712 = vld [vmem:[#allocation2 + $0x690] sm:$0xff]
    %v713 = vld [vmem:[#allocation2 + $0x698] sm:$0xff]
    %v714 = vld [vmem:[#allocation2 + $0x6a0] sm:$0xff]
    %v715 = vld [vmem:[#allocation2 + $0x6a8] sm:$0xff]
    %v716 = vld [vmem:[#allocation2 + $0x6b0] sm:$0xff]
    %v717 = vld [vmem:[#allocation2 + $0x6b8] sm:$0xff]
    %v718 = vld [vmem:[#allocation2 + $0x6c0] sm:$0xff]
    %v719 = vld [vmem:[#allocation2 + $0x6c8] sm:$0xff]
    %v720 = vld [vmem:[#allocation2 + $0x6d0] sm:$0xff]
    %v721 = vld [vmem:[#allocation2 + $0x6d8] sm:$0xff]
    %v722 = vld [vmem:[#allocation2 + $0x6e0] sm:$0xff]
    %v723 = vld [vmem:[#allocation2 + $0x6e8] sm:$0xff]
    %v724 = vld [vmem:[#allocation2 + $0x6f0] sm:$0xff]
    %v725 = vld [vmem:[#allocation2 + $0x6f8] sm:$0xff]
    %v726 = vld [vmem:[#allocation2 + $0x700] sm:$0xff]
    %v727 = vld [vmem:[#allocation2 + $0x708] sm:$0xff]
    %v728 = vld [vmem:[#allocation2 + $0x710] sm:$0xff]
    %v729 = vld [vmem:[#allocation2 + $0x718] sm:$0xff]
    %v730 = vld [vmem:[#allocation2 + $0x720] sm:$0xff]
    %v731 = vld [vmem:[#allocation2 + $0x728] sm:$0xff]
    %v732 = vld [vmem:[#allocation2 + $0x730] sm:$0xff]
    %v733 = vld [vmem:[#allocation2 + $0x738] sm:$0xff]
    %v734 = vld [vmem:[#allocation2 + $0x740] sm:$0xff]
    %v735 = vld [vmem:[#allocation2 + $0x748] sm:$0xff]
    %v736 = vld [vmem:[#allocation2 + $0x750] sm:$0xff]
    %v737 = vld [vmem:[#allocation2 + $0x758] sm:$0xff]
    %v738 = vld [vmem:[#allocation2 + $0x760] sm:$0xff]
    %v739 = vld [vmem:[#allocation2 + $0x768] sm:$0xff]
    %v740 = vld [vmem:[#allocation2 + $0x770] sm:$0xff]
    %v741 = vld [vmem:[#allocation2 + $0x778] sm:$0xff]
    %v742 = vld [vmem:[#allocation2 + $0x780] sm:$0xff]
    %v743 = vld [vmem:[#allocation2 + $0x788] sm:$0xff]
    %v744 = vld [vmem:[#allocation2 + $0x790] sm:$0xff]
    %v745 = vld [vmem:[#allocation2 + $0x798] sm:$0xff]
    %v746 = vld [vmem:[#allocation2 + $0x7a0] sm:$0xff]
    %v747 = vld [vmem:[#allocation2 + $0x7a8] sm:$0xff]
    %v748 = vld [vmem:[#allocation2 + $0x7b0] sm:$0xff]
    %v749 = vld [vmem:[#allocation2 + $0x7b8] sm:$0xff]
    %v750 = vld [vmem:[#allocation2 + $0x7c0] sm:$0xff]
    %v751 = vld [vmem:[#allocation2 + $0x7c8] sm:$0xff]
    %v752 = vld [vmem:[#allocation2 + $0x7d0] sm:$0xff]
    %v753 = vld [vmem:[#allocation2 + $0x7d8] sm:$0xff]
    %v754 = vld [vmem:[#allocation2 + $0x7e0] sm:$0xff]
    %v755 = vld [vmem:[#allocation2 + $0x7e8] sm:$0xff]
    %v756 = vld [vmem:[#allocation2 + $0x7f0] sm:$0xff]
    %v757 = vld [vmem:[#allocation2 + $0x7f8] sm:$0xff]
    %v758 = vld [vmem:[#allocation2 + $0x800] sm:$0xff]
    %v759 = vld [vmem:[#allocation2 + $0x808] sm:$0xff]
    %v760 = vld [vmem:[#allocation2 + $0x810] sm:$0xff]
    %v761 = vld [vmem:[#allocation2 + $0x818] sm:$0xff]
    %v762 = vld [vmem:[#allocation2 + $0x820] sm:$0xff]
    %v763 = vld [vmem:[#allocation2 + $0x828] sm:$0xff]
    %v764 = vld [vmem:[#allocation2 + $0x830] sm:$0xff]
    %v765 = vld [vmem:[#allocation2 + $0x838] sm:$0xff]
    %v766 = vld [vmem:[#allocation2 + $0x840] sm:$0xff]
    %v767 = vld [vmem:[#allocation2 + $0x848] sm:$0xff]
    %v768 = vld [vmem:[#allocation2 + $0x850] sm:$0xff]
    %v769 = vld [vmem:[#allocation2 + $0x858] sm:$0xff]
    %v770 = vld [vmem:[#allocation2 + $0x860] sm:$0xff]
    %v771 = vld [vmem:[#allocation2 + $0x868] sm:$0xff]
    %v772 = vld [vmem:[#allocation2 + $0x870] sm:$0xff]
    %v773 = vld [vmem:[#allocation2 + $0x878] sm:$0xff]
    %v774 = vld [vmem:[#allocation2 + $0x880] sm:$0xff]
    %v775 = vld [vmem:[#allocation2 + $0x888] sm:$0xff]
    %v776 = vld [vmem:[#allocation2 + $0x890] sm:$0xff]
    %v777 = vld [vmem:[#allocation2 + $0x898] sm:$0xff]
    %v778 = vld [vmem:[#allocation2 + $0x8a0] sm:$0xff]
    %v779 = vld [vmem:[#allocation2 + $0x8a8] sm:$0xff]
    %v780 = vld [vmem:[#allocation2 + $0x8b0] sm:$0xff]
    %v781 = vld [vmem:[#allocation2 + $0x8b8] sm:$0xff]
    %v782 = vld [vmem:[#allocation2 + $0x8c0] sm:$0xff]
    %v783 = vld [vmem:[#allocation2 + $0x8c8] sm:$0xff]
    %v784 = vld [vmem:[#allocation2 + $0x8d0] sm:$0xff]
    %v785 = vld [vmem:[#allocation2 + $0x8d8] sm:$0xff]
    %v786 = vld [vmem:[#allocation2 + $0x8e0] sm:$0xff]
    %v787 = vld [vmem:[#allocation2 + $0x8e8] sm:$0xff]
    %v788 = vld [vmem:[#allocation2 + $0x8f0] sm:$0xff]
    %v789 = vld [vmem:[#allocation2 + $0x8f8] sm:$0xff]
    %v790 = vld [vmem:[#allocation2 + $0x900] sm:$0xff]
    %v791 = vld [vmem:[#allocation2 + $0x908] sm:$0xff]
    %v792 = vld [vmem:[#allocation2 + $0x910] sm:$0xff]
    %v793 = vld [vmem:[#allocation2 + $0x918] sm:$0xff]
    %v794 = vld [vmem:[#allocation2 + $0x920] sm:$0xff]
    %v795 = vld [vmem:[#allocation2 + $0x928] sm:$0xff]
    %v796 = vld [vmem:[#allocation2 + $0x930] sm:$0xff]
    %v797 = vld [vmem:[#allocation2 + $0x938] sm:$0xff]
    %v798 = vld [vmem:[#allocation2 + $0x940] sm:$0xff]
    %v799 = vld [vmem:[#allocation2 + $0x948] sm:$0xff]
    %v800 = vld [vmem:[#allocation2 + $0x950] sm:$0xff]
    %v801 = vld [vmem:[#allocation2 + $0x958] sm:$0xff]
    %v802 = vld [vmem:[#allocation2 + $0x960] sm:$0xff]
    %v803 = vld [vmem:[#allocation2 + $0x968] sm:$0xff]
    %v804 = vld [vmem:[#allocation2 + $0x970] sm:$0xff]
    %v805 = vld [vmem:[#allocation2 + $0x978] sm:$0xff]
    %v806 = vld [vmem:[#allocation2 + $0x980] sm:$0xff]
    %v807 = vld [vmem:[#allocation2 + $0x988] sm:$0xff]
    %v808 = vld [vmem:[#allocation2 + $0x990] sm:$0xff]
    %v809 = vld [vmem:[#allocation2 + $0x998] sm:$0xff]
    %v810 = vld [vmem:[#allocation2 + $0x9a0] sm:$0xff]
    %v811 = vld [vmem:[#allocation2 + $0x9a8] sm:$0xff]
    %v812 = vld [vmem:[#allocation2 + $0x9b0] sm:$0xff]
    %v813 = vld [vmem:[#allocation2 + $0x9b8] sm:$0xff]
    %v814 = vld [vmem:[#allocation2 + $0x9c0] sm:$0xff]
    %v815 = vld [vmem:[#allocation2 + $0x9c8] sm:$0xff]
    %v816 = vld [vmem:[#allocation2 + $0x9d0] sm:$0xff]
    %v817 = vld [vmem:[#allocation2 + $0x9d8] sm:$0xff]
    %v818 = vld [vmem:[#allocation2 + $0x9e0] sm:$0xff]
    %v819 = vld [vmem:[#allocation2 + $0x9e8] sm:$0xff]
    %v820 = vld [vmem:[#allocation2 + $0x9f0] sm:$0xff]
    %v821 = vld [vmem:[#allocation2 + $0x9f8] sm:$0xff]
    %v822 = vld [vmem:[#allocation2 + $0xa00] sm:$0xff]
    %v823 = vld [vmem:[#allocation2 + $0xa08] sm:$0xff]
    %v824 = vld [vmem:[#allocation2 + $0xa10] sm:$0xff]
    %v825 = vld [vmem:[#allocation2 + $0xa18] sm:$0xff]
    %v826 = vld [vmem:[#allocation2 + $0xa20] sm:$0xff]
    %v827 = vld [vmem:[#allocation2 + $0xa28] sm:$0xff]
    %v828 = vld [vmem:[#allocation2 + $0xa30] sm:$0xff]
    %v829 = vld [vmem:[#allocation2 + $0xa38] sm:$0xff]
    %v830 = vld [vmem:[#allocation2 + $0xa40] sm:$0xff]
    %v831 = vld [vmem:[#allocation2 + $0xa48] sm:$0xff]
    %v832 = vld [vmem:[#allocation2 + $0xa50] sm:$0xff]
    %v833 = vld [vmem:[#allocation2 + $0xa58] sm:$0xff]
    %v834 = vld [vmem:[#allocation2 + $0xa60] sm:$0xff]
    %v835 = vld [vmem:[#allocation2 + $0xa68] sm:$0xff]
    %v836 = vld [vmem:[#allocation2 + $0xa70] sm:$0xff]
    %v837 = vld [vmem:[#allocation2 + $0xa78] sm:$0xff]
    %v838 = vld [vmem:[#allocation2 + $0xa80] sm:$0xff]
    %v839 = vld [vmem:[#allocation2 + $0xa88] sm:$0xff]
    %v840 = vld [vmem:[#allocation2 + $0xa90] sm:$0xff]
    %v841 = vld [vmem:[#allocation2 + $0xa98] sm:$0xff]
    %v842 = vld [vmem:[#allocation2 + $0xaa0] sm:$0xff]
    %v843 = vld [vmem:[#allocation2 + $0xaa8] sm:$0xff]
    %v844 = vld [vmem:[#allocation2 + $0xab0] sm:$0xff]
    %v845 = vld [vmem:[#allocation2 + $0xab8] sm:$0xff]
    %v846 = vld [vmem:[#allocation2 + $0xac0] sm:$0xff]
    %v847 = vld [vmem:[#allocation2 + $0xac8] sm:$0xff]
    %v848 = vld [vmem:[#allocation2 + $0xad0] sm:$0xff]
    %v849 = vld [vmem:[#allocation2 + $0xad8] sm:$0xff]
    %v850 = vld [vmem:[#allocation2 + $0xae0] sm:$0xff]
    %v851 = vld [vmem:[#allocation2 + $0xae8] sm:$0xff]
    %v852 = vld [vmem:[#allocation2 + $0xaf0] sm:$0xff]
    %v853 = vld [vmem:[#allocation2 + $0xaf8] sm:$0xff]
    %v854 = vld [vmem:[#allocation2 + $0xb00] sm:$0xff]
    %v855 = vld [vmem:[#allocation2 + $0xb08] sm:$0xff]
    %v856 = vld [vmem:[#allocation2 + $0xb10] sm:$0xff]
    %v857 = vld [vmem:[#allocation2 + $0xb18] sm:$0xff]
    %v858 = vld [vmem:[#allocation2 + $0xb20] sm:$0xff]
    %v859 = vld [vmem:[#allocation2 + $0xb28] sm:$0xff]
    %v860 = vld [vmem:[#allocation2 + $0xb30] sm:$0xff]
    %v861 = vld [vmem:[#allocation2 + $0xb38] sm:$0xff]
    %v862 = vld [vmem:[#allocation2 + $0xb40] sm:$0xff]
    %v863 = vld [vmem:[#allocation2 + $0xb48] sm:$0xff]
    %v864 = vld [vmem:[#allocation2 + $0xb50] sm:$0xff]
    %v865 = vld [vmem:[#allocation2 + $0xb58] sm:$0xff]
    %v866 = vld [vmem:[#allocation2 + $0xb60] sm:$0xff]
    %v867 = vld [vmem:[#allocation2 + $0xb68] sm:$0xff]
    %v868 = vld [vmem:[#allocation2 + $0xb70] sm:$0xff]
    %v869 = vld [vmem:[#allocation2 + $0xb78] sm:$0xff]
    %v870 = vld [vmem:[#allocation5] sm:$0xff]
    %v872 = vlaneseq
    %v873 = vshrl.u32 %v872, 7
    %v874 = vsub.s32 0, %v873
    %v875 = vrot.slane %v870, %v874
    %v876 = vlaneseq
    %v877 = vshrl.u32 %v876, 7
    %v878 = vsub.s32 1, %v877
    %v879 = vrot.slane %v870, %v878
    %v880 = vlaneseq
    %v881 = vshrl.u32 %v880, 7
    %v882 = vsub.s32 2, %v881
    %v883 = vrot.slane %v870, %v882
    %v884 = vlaneseq
    %v885 = vshrl.u32 %v884, 7
    %v886 = vsub.s32 3, %v885
    %v887 = vrot.slane %v870, %v886
    %v888 = vlaneseq
    %v889 = vshrl.u32 %v888, 7
    %v890 = vsub.s32 4, %v889
    %v891 = vrot.slane %v870, %v890
    %v892 = vlaneseq
    %v893 = vshrl.u32 %v892, 7
    %v894 = vsub.s32 5, %v893
    %v895 = vrot.slane %v870, %v894
    %v896 = vlaneseq
    %v897 = vshrl.u32 %v896, 7
    %v898 = vsub.s32 6, %v897
    %v899 = vrot.slane %v870, %v898
    %v900 = vlaneseq
    %v901 = vshrl.u32 %v900, 7
    %v902 = vsub.s32 7, %v901
    %v903 = vrot.slane %v870, %v902
    %v1004 = vlaneseq
    %v1005 = vand.u32 %v1004, 127
    %v1006 = vlaneseq
    %v1007 = vshrl.u32 %v1006, 7
    %v1008 = vsub.s32 %v1005, %v1007
    %v1009 = vrot.slane %v410, %v1008
    %v1010 = vadd.s32 %v1005, 4294967288
    %v1011 = vlaneseq
    %v1012 = vshrl.u32 %v1011, 7
    %v1013 = vsub.s32 %v1010, %v1012
    %v1014 = vrot.slane %v411, %v1013
    %vm1015 = vcmask 130112
    %v1016 = vsel %vm1015, %v1014, %v1009
    %v1017 = vadd.s32 %v1005, 4294967280
    %v1018 = vlaneseq
    %v1019 = vshrl.u32 %v1018, 7
    %v1020 = vsub.s32 %v1017, %v1019
    %v1021 = vrot.slane %v412, %v1020
    %vm1022 = vcmask 195712
    %v1023 = vsel %vm1022, %v1021, %v1016
    %v1024 = vadd.s32 %v1005, 4294967272
    %v1025 = vlaneseq
    %v1026 = vshrl.u32 %v1025, 7
    %v1027 = vsub.s32 %v1024, %v1026
    %v1028 = vrot.slane %v413, %v1027
    %vm1029 = vcmask 261312
    %v1030 = vsel %vm1029, %v1028, %v1023
    %v1031 = vadd.s32 %v1005, 4294967264
    %v1032 = vlaneseq
    %v1033 = vshrl.u32 %v1032, 7
    %v1034 = vsub.s32 %v1031, %v1033
    %v1035 = vrot.slane %v414, %v1034
    %vm1036 = vcmask 326912
    %v1037 = vsel %vm1036, %v1035, %v1030
    %v1038 = vadd.s32 %v1005, 4294967256
    %v1039 = vlaneseq
    %v1040 = vshrl.u32 %v1039, 7
    %v1041 = vsub.s32 %v1038, %v1040
    %v1042 = vrot.slane %v415, %v1041
    %vm1043 = vcmask 392512
    %v1044 = vsel %vm1043, %v1042, %v1037
    %v1045 = vadd.s32 %v1005, 4294967248
    %v1046 = vlaneseq
    %v1047 = vshrl.u32 %v1046, 7
    %v1048 = vsub.s32 %v1045, %v1047
    %v1049 = vrot.slane %v416, %v1048
    %vm1050 = vcmask 458112
    %v1051 = vsel %vm1050, %v1049, %v1044
    %v1052 = vadd.s32 %v1005, 4294967240
    %v1053 = vlaneseq
    %v1054 = vshrl.u32 %v1053, 7
    %v1055 = vsub.s32 %v1052, %v1054
    %v1056 = vrot.slane %v417, %v1055
    %vm1057 = vcmask 523712
    %v1058 = vsel %vm1057, %v1056, %v1051
    %v1059 = vadd.s32 %v1005, 4294967232
    %v1060 = vlaneseq
    %v1061 = vshrl.u32 %v1060, 7
    %v1062 = vsub.s32 %v1059, %v1061
    %v1063 = vrot.slane %v418, %v1062
    %vm1064 = vcmask 589312
    %v1065 = vsel %vm1064, %v1063, %v1058
    %v1066 = vadd.s32 %v1005, 4294967224
    %v1067 = vlaneseq
    %v1068 = vshrl.u32 %v1067, 7
    %v1069 = vsub.s32 %v1066, %v1068
    %v1070 = vrot.slane %v419, %v1069
    %vm1071 = vcmask 654912
    %v1072 = vsel %vm1071, %v1070, %v1065
    %v1073 = vadd.s32 %v1005, 4294967216
    %v1074 = vlaneseq
    %v1075 = vshrl.u32 %v1074, 7
    %v1076 = vsub.s32 %v1073, %v1075
    %v1077 = vrot.slane %v420, %v1076
    %vm1078 = vcmask 720512
    %v1079 = vsel %vm1078, %v1077, %v1072
    %v1080 = vadd.s32 %v1005, 4294967208
    %v1081 = vlaneseq
    %v1082 = vshrl.u32 %v1081, 7
    %v1083 = vsub.s32 %v1080, %v1082
    %v1084 = vrot.slane %v421, %v1083
    %vm1085 = vcmask 786112
    %v1086 = vsel %vm1085, %v1084, %v1079
    %v1087 = vadd.s32 %v1005, 4294967200
    %v1088 = vlaneseq
    %v1089 = vshrl.u32 %v1088, 7
    %v1090 = vsub.s32 %v1087, %v1089
    %v1091 = vrot.slane %v422, %v1090
    %vm1092 = vcmask 851712
    %v1093 = vsel %vm1092, %v1091, %v1086
    %v1094 = vadd.s32 %v1005, 4294967192
    %v1095 = vlaneseq
    %v1096 = vshrl.u32 %v1095, 7
    %v1097 = vsub.s32 %v1094, %v1096
    %v1098 = vrot.slane %v423, %v1097
    %vm1099 = vcmask 917312
    %v1100 = vsel %vm1099, %v1098, %v1093
    %v1101 = vadd.s32 %v1005, 4294967184
    %v1102 = vlaneseq
    %v1103 = vshrl.u32 %v1102, 7
    %v1104 = vsub.s32 %v1101, %v1103
    %v1105 = vrot.slane %v424, %v1104
    %vm1106 = vcmask 982912
    %v1107 = vsel %vm1106, %v1105, %v1100
    %v1108 = vadd.s32 %v1005, 4294967176
    %v1109 = vlaneseq
    %v1110 = vshrl.u32 %v1109, 7
    %v1111 = vsub.s32 %v1108, %v1110
    %v1112 = vrot.slane %v425, %v1111
    %vm1113 = vcmask 1048512
    %v1114 = vsel %vm1113, %v1112, %v1107
    %v1115 = vlaneseq
    %v1116 = vshrl.u32 %v1115, 7
    %v1117 = vsub.s32 %v1005, %v1116
    %v1118 = vrot.slane %v426, %v1117
    %v1119 = vlaneseq
    %v1120 = vshrl.u32 %v1119, 7
    %v1121 = vsub.s32 %v1010, %v1120
    %v1122 = vrot.slane %v427, %v1121
    %v1123 = vsel %vm1015, %v1122, %v1118
    %v1124 = vlaneseq
    %v1125 = vshrl.u32 %v1124, 7
    %v1126 = vsub.s32 %v1017, %v1125
    %v1127 = vrot.slane %v428, %v1126
    %v1128 = vsel %vm1022, %v1127, %v1123
    %v1129 = vlaneseq
    %v1130 = vshrl.u32 %v1129, 7
    %v1131 = vsub.s32 %v1024, %v1130
    %v1132 = vrot.slane %v429, %v1131
    %v1133 = vsel %vm1029, %v1132, %v1128
    %v1134 = vlaneseq
    %v1135 = vshrl.u32 %v1134, 7
    %v1136 = vsub.s32 %v1031, %v1135
    %v1137 = vrot.slane %v430, %v1136
    %v1138 = vsel %vm1036, %v1137, %v1133
    %v1139 = vlaneseq
    %v1140 = vshrl.u32 %v1139, 7
    %v1141 = vsub.s32 %v1038, %v1140
    %v1142 = vrot.slane %v431, %v1141
    %v1143 = vsel %vm1043, %v1142, %v1138
    %v1144 = vlaneseq
    %v1145 = vshrl.u32 %v1144, 7
    %v1146 = vsub.s32 %v1045, %v1145
    %v1147 = vrot.slane %v432, %v1146
    %v1148 = vsel %vm1050, %v1147, %v1143
    %v1149 = vlaneseq
    %v1150 = vshrl.u32 %v1149, 7
    %v1151 = vsub.s32 %v1052, %v1150
    %v1152 = vrot.slane %v433, %v1151
    %v1153 = vsel %vm1057, %v1152, %v1148
    %v1154 = vlaneseq
    %v1155 = vshrl.u32 %v1154, 7
    %v1156 = vsub.s32 %v1059, %v1155
    %v1157 = vrot.slane %v434, %v1156
    %v1158 = vsel %vm1064, %v1157, %v1153
    %v1159 = vlaneseq
    %v1160 = vshrl.u32 %v1159, 7
    %v1161 = vsub.s32 %v1066, %v1160
    %v1162 = vrot.slane %v435, %v1161
    %v1163 = vsel %vm1071, %v1162, %v1158
    %v1164 = vlaneseq
    %v1165 = vshrl.u32 %v1164, 7
    %v1166 = vsub.s32 %v1073, %v1165
    %v1167 = vrot.slane %v436, %v1166
    %v1168 = vsel %vm1078, %v1167, %v1163
    %v1169 = vlaneseq
    %v1170 = vshrl.u32 %v1169, 7
    %v1171 = vsub.s32 %v1080, %v1170
    %v1172 = vrot.slane %v437, %v1171
    %v1173 = vsel %vm1085, %v1172, %v1168
    %v1174 = vlaneseq
    %v1175 = vshrl.u32 %v1174, 7
    %v1176 = vsub.s32 %v1087, %v1175
    %v1177 = vrot.slane %v438, %v1176
    %v1178 = vsel %vm1092, %v1177, %v1173
    %v1179 = vlaneseq
    %v1180 = vshrl.u32 %v1179, 7
    %v1181 = vsub.s32 %v1094, %v1180
    %v1182 = vrot.slane %v439, %v1181
    %v1183 = vsel %vm1099, %v1182, %v1178
    %v1184 = vlaneseq
    %v1185 = vshrl.u32 %v1184, 7
    %v1186 = vsub.s32 %v1101, %v1185
    %v1187 = vrot.slane %v440, %v1186
    %v1188 = vsel %vm1106, %v1187, %v1183
    %v1189 = vlaneseq
    %v1190 = vshrl.u32 %v1189, 7
    %v1191 = vsub.s32 %v1108, %v1190
    %v1192 = vrot.slane %v441, %v1191
    %v1193 = vsel %vm1113, %v1192, %v1188
    %v1194 = vlaneseq
    %v1195 = vshrl.u32 %v1194, 7
    %v1196 = vsub.s32 %v1005, %v1195
    %v1197 = vrot.slane %v442, %v1196
    %v1198 = vlaneseq
    %v1199 = vshrl.u32 %v1198, 7
    %v1200 = vsub.s32 %v1010, %v1199
    %v1201 = vrot.slane %v443, %v1200
    %v1202 = vsel %vm1015, %v1201, %v1197
    %v1203 = vlaneseq
    %v1204 = vshrl.u32 %v1203, 7
    %v1205 = vsub.s32 %v1017, %v1204
    %v1206 = vrot.slane %v444, %v1205
    %v1207 = vsel %vm1022, %v1206, %v1202
    %v1208 = vlaneseq
    %v1209 = vshrl.u32 %v1208, 7
    %v1210 = vsub.s32 %v1024, %v1209
    %v1211 = vrot.slane %v445, %v1210
    %v1212 = vsel %vm1029, %v1211, %v1207
    %v1213 = vlaneseq
    %v1214 = vshrl.u32 %v1213, 7
    %v1215 = vsub.s32 %v1031, %v1214
    %v1216 = vrot.slane %v446, %v1215
    %v1217 = vsel %vm1036, %v1216, %v1212
    %v1218 = vlaneseq
    %v1219 = vshrl.u32 %v1218, 7
    %v1220 = vsub.s32 %v1038, %v1219
    %v1221 = vrot.slane %v447, %v1220
    %v1222 = vsel %vm1043, %v1221, %v1217
    %v1223 = vlaneseq
    %v1224 = vshrl.u32 %v1223, 7
    %v1225 = vsub.s32 %v1045, %v1224
    %v1226 = vrot.slane %v448, %v1225
    %v1227 = vsel %vm1050, %v1226, %v1222
    %v1228 = vlaneseq
    %v1229 = vshrl.u32 %v1228, 7
    %v1230 = vsub.s32 %v1052, %v1229
    %v1231 = vrot.slane %v449, %v1230
    %v1232 = vsel %vm1057, %v1231, %v1227
    %v1233 = vlaneseq
    %v1234 = vshrl.u32 %v1233, 7
    %v1235 = vsub.s32 %v1059, %v1234
    %v1236 = vrot.slane %v450, %v1235
    %v1237 = vsel %vm1064, %v1236, %v1232
    %v1238 = vlaneseq
    %v1239 = vshrl.u32 %v1238, 7
    %v1240 = vsub.s32 %v1066, %v1239
    %v1241 = vrot.slane %v451, %v1240
    %v1242 = vsel %vm1071, %v1241, %v1237
    %v1243 = vlaneseq
    %v1244 = vshrl.u32 %v1243, 7
    %v1245 = vsub.s32 %v1073, %v1244
    %v1246 = vrot.slane %v452, %v1245
    %v1247 = vsel %vm1078, %v1246, %v1242
    %v1248 = vlaneseq
    %v1249 = vshrl.u32 %v1248, 7
    %v1250 = vsub.s32 %v1080, %v1249
    %v1251 = vrot.slane %v453, %v1250
    %v1252 = vsel %vm1085, %v1251, %v1247
    %v1253 = vlaneseq
    %v1254 = vshrl.u32 %v1253, 7
    %v1255 = vsub.s32 %v1087, %v1254
    %v1256 = vrot.slane %v454, %v1255
    %v1257 = vsel %vm1092, %v1256, %v1252
    %v1258 = vlaneseq
    %v1259 = vshrl.u32 %v1258, 7
    %v1260 = vsub.s32 %v1094, %v1259
    %v1261 = vrot.slane %v455, %v1260
    %v1262 = vsel %vm1099, %v1261, %v1257
    %v1263 = vlaneseq
    %v1264 = vshrl.u32 %v1263, 7
    %v1265 = vsub.s32 %v1005, %v1264
    %v1266 = vrot.slane %v456, %v1265
    %v1267 = vlaneseq
    %v1268 = vshrl.u32 %v1267, 7
    %v1269 = vsub.s32 %v1010, %v1268
    %v1270 = vrot.slane %v457, %v1269
    %v1271 = vsel %vm1015, %v1270, %v1266
    %v1272 = vlaneseq
    %v1273 = vshrl.u32 %v1272, 7
    %v1274 = vsub.s32 %v1017, %v1273
    %v1275 = vrot.slane %v458, %v1274
    %v1276 = vsel %vm1022, %v1275, %v1271
    %v1277 = vlaneseq
    %v1278 = vshrl.u32 %v1277, 7
    %v1279 = vsub.s32 %v1024, %v1278
    %v1280 = vrot.slane %v459, %v1279
    %v1281 = vsel %vm1029, %v1280, %v1276
    %v1282 = vlaneseq
    %v1283 = vshrl.u32 %v1282, 7
    %v1284 = vsub.s32 %v1031, %v1283
    %v1285 = vrot.slane %v460, %v1284
    %v1286 = vsel %vm1036, %v1285, %v1281
    %v1287 = vlaneseq
    %v1288 = vshrl.u32 %v1287, 7
    %v1289 = vsub.s32 %v1038, %v1288
    %v1290 = vrot.slane %v461, %v1289
    %v1291 = vsel %vm1043, %v1290, %v1286
    %v1292 = vlaneseq
    %v1293 = vshrl.u32 %v1292, 7
    %v1294 = vsub.s32 %v1045, %v1293
    %v1295 = vrot.slane %v462, %v1294
    %v1296 = vsel %vm1050, %v1295, %v1291
    %v1297 = vlaneseq
    %v1298 = vshrl.u32 %v1297, 7
    %v1299 = vsub.s32 %v1052, %v1298
    %v1300 = vrot.slane %v463, %v1299
    %v1301 = vsel %vm1057, %v1300, %v1296
    %v1302 = vlaneseq
    %v1303 = vshrl.u32 %v1302, 7
    %v1304 = vsub.s32 %v1059, %v1303
    %v1305 = vrot.slane %v464, %v1304
    %v1306 = vsel %vm1064, %v1305, %v1301
    %v1307 = vlaneseq
    %v1308 = vshrl.u32 %v1307, 7
    %v1309 = vsub.s32 %v1066, %v1308
    %v1310 = vrot.slane %v465, %v1309
    %v1311 = vsel %vm1071, %v1310, %v1306
    %v1312 = vlaneseq
    %v1313 = vshrl.u32 %v1312, 7
    %v1314 = vsub.s32 %v1073, %v1313
    %v1315 = vrot.slane %v466, %v1314
    %v1316 = vsel %vm1078, %v1315, %v1311
    %v1317 = vlaneseq
    %v1318 = vshrl.u32 %v1317, 7
    %v1319 = vsub.s32 %v1080, %v1318
    %v1320 = vrot.slane %v467, %v1319
    %v1321 = vsel %vm1085, %v1320, %v1316
    %v1322 = vlaneseq
    %v1323 = vshrl.u32 %v1322, 7
    %v1324 = vsub.s32 %v1087, %v1323
    %v1325 = vrot.slane %v468, %v1324
    %v1326 = vsel %vm1092, %v1325, %v1321
    %v1327 = vlaneseq
    %v1328 = vshrl.u32 %v1327, 7
    %v1329 = vsub.s32 %v1094, %v1328
    %v1330 = vrot.slane %v469, %v1329
    %v1331 = vsel %vm1099, %v1330, %v1326
    %v1332 = vlaneseq
    %v1333 = vshrl.u32 %v1332, 7
    %v1334 = vsub.s32 %v1101, %v1333
    %v1335 = vrot.slane %v470, %v1334
    %v1336 = vsel %vm1106, %v1335, %v1331
    %v1337 = vlaneseq
    %v1338 = vshrl.u32 %v1337, 7
    %v1339 = vsub.s32 %v1108, %v1338
    %v1340 = vrot.slane %v471, %v1339
    %v1341 = vsel %vm1113, %v1340, %v1336
    %v1342 = vlaneseq
    %v1343 = vshrl.u32 %v1342, 7
    %v1344 = vsub.s32 %v1005, %v1343
    %v1345 = vrot.slane %v472, %v1344
    %v1346 = vlaneseq
    %v1347 = vshrl.u32 %v1346, 7
    %v1348 = vsub.s32 %v1010, %v1347
    %v1349 = vrot.slane %v473, %v1348
    %v1350 = vsel %vm1015, %v1349, %v1345
    %v1351 = vlaneseq
    %v1352 = vshrl.u32 %v1351, 7
    %v1353 = vsub.s32 %v1017, %v1352
    %v1354 = vrot.slane %v474, %v1353
    %v1355 = vsel %vm1022, %v1354, %v1350
    %v1356 = vlaneseq
    %v1357 = vshrl.u32 %v1356, 7
    %v1358 = vsub.s32 %v1024, %v1357
    %v1359 = vrot.slane %v475, %v1358
    %v1360 = vsel %vm1029, %v1359, %v1355
    %v1361 = vlaneseq
    %v1362 = vshrl.u32 %v1361, 7
    %v1363 = vsub.s32 %v1031, %v1362
    %v1364 = vrot.slane %v476, %v1363
    %v1365 = vsel %vm1036, %v1364, %v1360
    %v1366 = vlaneseq
    %v1367 = vshrl.u32 %v1366, 7
    %v1368 = vsub.s32 %v1038, %v1367
    %v1369 = vrot.slane %v477, %v1368
    %v1370 = vsel %vm1043, %v1369, %v1365
    %v1371 = vlaneseq
    %v1372 = vshrl.u32 %v1371, 7
    %v1373 = vsub.s32 %v1045, %v1372
    %v1374 = vrot.slane %v478, %v1373
    %v1375 = vsel %vm1050, %v1374, %v1370
    %v1376 = vlaneseq
    %v1377 = vshrl.u32 %v1376, 7
    %v1378 = vsub.s32 %v1052, %v1377
    %v1379 = vrot.slane %v479, %v1378
    %v1380 = vsel %vm1057, %v1379, %v1375
    %v1381 = vlaneseq
    %v1382 = vshrl.u32 %v1381, 7
    %v1383 = vsub.s32 %v1059, %v1382
    %v1384 = vrot.slane %v480, %v1383
    %v1385 = vsel %vm1064, %v1384, %v1380
    %v1386 = vlaneseq
    %v1387 = vshrl.u32 %v1386, 7
    %v1388 = vsub.s32 %v1066, %v1387
    %v1389 = vrot.slane %v481, %v1388
    %v1390 = vsel %vm1071, %v1389, %v1385
    %v1391 = vlaneseq
    %v1392 = vshrl.u32 %v1391, 7
    %v1393 = vsub.s32 %v1073, %v1392
    %v1394 = vrot.slane %v482, %v1393
    %v1395 = vsel %vm1078, %v1394, %v1390
    %v1396 = vlaneseq
    %v1397 = vshrl.u32 %v1396, 7
    %v1398 = vsub.s32 %v1080, %v1397
    %v1399 = vrot.slane %v483, %v1398
    %v1400 = vsel %vm1085, %v1399, %v1395
    %v1401 = vlaneseq
    %v1402 = vshrl.u32 %v1401, 7
    %v1403 = vsub.s32 %v1087, %v1402
    %v1404 = vrot.slane %v484, %v1403
    %v1405 = vsel %vm1092, %v1404, %v1400
    %v1406 = vlaneseq
    %v1407 = vshrl.u32 %v1406, 7
    %v1408 = vsub.s32 %v1094, %v1407
    %v1409 = vrot.slane %v485, %v1408
    %v1410 = vsel %vm1099, %v1409, %v1405
    %v1411 = vlaneseq
    %v1412 = vshrl.u32 %v1411, 7
    %v1413 = vsub.s32 %v1101, %v1412
    %v1414 = vrot.slane %v486, %v1413
    %v1415 = vsel %vm1106, %v1414, %v1410
    %v1416 = vlaneseq
    %v1417 = vshrl.u32 %v1416, 7
    %v1418 = vsub.s32 %v1108, %v1417
    %v1419 = vrot.slane %v487, %v1418
    %v1420 = vsel %vm1113, %v1419, %v1415
    %v1421 = vlaneseq
    %v1422 = vshrl.u32 %v1421, 7
    %v1423 = vsub.s32 %v1005, %v1422
    %v1424 = vrot.slane %v488, %v1423
    %v1425 = vlaneseq
    %v1426 = vshrl.u32 %v1425, 7
    %v1427 = vsub.s32 %v1010, %v1426
    %v1428 = vrot.slane %v489, %v1427
    %v1429 = vsel %vm1015, %v1428, %v1424
    %v1430 = vlaneseq
    %v1431 = vshrl.u32 %v1430, 7
    %v1432 = vsub.s32 %v1017, %v1431
    %v1433 = vrot.slane %v490, %v1432
    %v1434 = vsel %vm1022, %v1433, %v1429
    %v1435 = vlaneseq
    %v1436 = vshrl.u32 %v1435, 7
    %v1437 = vsub.s32 %v1024, %v1436
    %v1438 = vrot.slane %v491, %v1437
    %v1439 = vsel %vm1029, %v1438, %v1434
    %v1440 = vlaneseq
    %v1441 = vshrl.u32 %v1440, 7
    %v1442 = vsub.s32 %v1031, %v1441
    %v1443 = vrot.slane %v492, %v1442
    %v1444 = vsel %vm1036, %v1443, %v1439
    %v1445 = vlaneseq
    %v1446 = vshrl.u32 %v1445, 7
    %v1447 = vsub.s32 %v1038, %v1446
    %v1448 = vrot.slane %v493, %v1447
    %v1449 = vsel %vm1043, %v1448, %v1444
    %v1450 = vlaneseq
    %v1451 = vshrl.u32 %v1450, 7
    %v1452 = vsub.s32 %v1045, %v1451
    %v1453 = vrot.slane %v494, %v1452
    %v1454 = vsel %vm1050, %v1453, %v1449
    %v1455 = vlaneseq
    %v1456 = vshrl.u32 %v1455, 7
    %v1457 = vsub.s32 %v1052, %v1456
    %v1458 = vrot.slane %v495, %v1457
    %v1459 = vsel %vm1057, %v1458, %v1454
    %v1460 = vlaneseq
    %v1461 = vshrl.u32 %v1460, 7
    %v1462 = vsub.s32 %v1059, %v1461
    %v1463 = vrot.slane %v496, %v1462
    %v1464 = vsel %vm1064, %v1463, %v1459
    %v1465 = vlaneseq
    %v1466 = vshrl.u32 %v1465, 7
    %v1467 = vsub.s32 %v1066, %v1466
    %v1468 = vrot.slane %v497, %v1467
    %v1469 = vsel %vm1071, %v1468, %v1464
    %v1470 = vlaneseq
    %v1471 = vshrl.u32 %v1470, 7
    %v1472 = vsub.s32 %v1073, %v1471
    %v1473 = vrot.slane %v498, %v1472
    %v1474 = vsel %vm1078, %v1473, %v1469
    %v1475 = vlaneseq
    %v1476 = vshrl.u32 %v1475, 7
    %v1477 = vsub.s32 %v1080, %v1476
    %v1478 = vrot.slane %v499, %v1477
    %v1479 = vsel %vm1085, %v1478, %v1474
    %v1480 = vlaneseq
    %v1481 = vshrl.u32 %v1480, 7
    %v1482 = vsub.s32 %v1087, %v1481
    %v1483 = vrot.slane %v500, %v1482
    %v1484 = vsel %vm1092, %v1483, %v1479
    %v1485 = vlaneseq
    %v1486 = vshrl.u32 %v1485, 7
    %v1487 = vsub.s32 %v1094, %v1486
    %v1488 = vrot.slane %v501, %v1487
    %v1489 = vsel %vm1099, %v1488, %v1484
    %vm1490 = vcmask 1041409
    %v1491 = vsel %vm1490, %v1341, %v1114
    %v1492 = vsel %vm1490, %v1420, %v1193
    %v1493 = vsel %vm1490, %v1489, %v1262
    %vm1496 = vcmask 916480
    %v1497 = vsel %vm1496, %v1493, 0
    %1499 = vmatprep.subr.mxu0 %v503
    %1500 = vmatpush1.msra.mxu0 %v502
    %1501 = vmatprep.subr.mxu0 %v511
    %1502 = vmatpush1.msra.mxu0 %v510
    %1503 = vmatprep.subr.mxu0 %v519
    %1504 = vmatpush1.msra.mxu0 %v518
    %1505 = vmatprep.subr.mxu0 %v527
    %1506 = vmatpush1.msra.mxu0 %v526
    %1507 = vmatprep.subr.mxu0 %v535
    %1508 = vmatpush1.msra.mxu0 %v534
    %1509 = vmatprep.subr.mxu0 %v543
    %1510 = vmatpush1.msra.mxu0 %v542
    %1511 = vmatprep.subr.mxu0 %v551
    %1512 = vmatpush1.msra.mxu0 %v550
    %1513 = vmatprep.subr.mxu0 %v559
    %1514 = vmatpush1.msra.mxu0 %v558
    %1515 = vmatprep.subr.mxu0 %v567
    %1516 = vmatpush1.msra.mxu0 %v566
    %1517 = vmatprep.subr.mxu0 %v575
    %1518 = vmatpush1.msra.mxu0 %v574
    %1519 = vmatprep.subr.mxu0 %v583
    %1520 = vmatpush1.msra.mxu0 %v582
    %1521 = vmatprep.subr.mxu0 %v591
    %1522 = vmatpush1.msra.mxu0 %v590
    %1523 = vmatprep.subr.mxu0 %v599
    %1524 = vmatpush1.msra.mxu0 %v598
    %1525 = vmatprep.subr.mxu0 %v607
    %1526 = vmatpush1.msra.mxu0 %v606
    %1527 = vmatprep.subr.mxu0 %v615
    %1528 = vmatpush1.msra.mxu0 %v614
    %1529 = vmatprep.subr.mxu0 %v623
    %1530 = vmatpush1.msra.mxu0 %v622
    %1531 = vmatprep.subr.mxu0 %v631
    %1532 = vmatpush1.msra.mxu0 %v630
    %1533 = vmatprep.subr.mxu0 %v639
    %1534 = vmatpush1.msra.mxu0 %v638
    %1535 = vmatprep.subr.mxu0 %v647
    %1536 = vmatpush1.msra.mxu0 %v646
    %1537 = vmatprep.subr.mxu0 %v655
    %1538 = vmatpush1.msra.mxu0 %v654
    %1539 = vmatprep.subr.mxu0 %v663
    %1540 = vmatpush1.msra.mxu0 %v662
    %1541 = vmatprep.subr.mxu0 %v671
    %1542 = vmatpush1.msra.mxu0 %v670
    %1543 = vmatprep.subr.mxu0 %v679
    %1544 = vmatpush1.msra.mxu0 %v678
    %1545 = vmatprep.subr.mxu0 %v687
    %1546 = vmatpush1.msra.mxu0 %v686
    %1547 = vmatprep.subr.mxu0 %v695
    %1548 = vmatpush1.msra.mxu0 %v694
    %1549 = vmatprep.subr.mxu0 %v703
    %1550 = vmatpush1.msra.mxu0 %v702
    %1551 = vmatprep.subr.mxu0 %v711
    %1552 = vmatpush1.msra.mxu0 %v710
    %1553 = vmatprep.subr.mxu0 %v719
    %1554 = vmatpush1.msra.mxu0 %v718
    %1555 = vmatprep.subr.mxu0 %v727
    %1556 = vmatpush1.msra.mxu0 %v726
    %1557 = vmatprep.subr.mxu0 %v735
    %1558 = vmatpush1.msra.mxu0 %v734
    %1559 = vmatprep.subr.mxu0 %v743
    %1560 = vmatpush1.msra.mxu0 %v742
    %1561 = vmatprep.subr.mxu0 %v751
    %1562 = vmatpush1.msra.mxu0 %v750
    %1563 = vmatprep.mubr.f32.mxu0 %v1492
    %1564 = vmatmul.mubr.f32.gmra.mrb[0].mxu0 %v1491
    %v1565 = vpop.f32.mrb[0].mxu0
    %v1566 = vadd.f32 %v875, %v1565
    %v1567 = vpop.f32.mrb[0].mxu0
    %v1568 = vadd.f32 %v879, %v1567
    %1569 = vdwg.mxu0
    %1570 = vmatprep.subr.mxu0 %v759
    %1571 = vmatpush1.msra.mxu0 %v758
    %1572 = vmatprep.subr.mxu0 %v767
    %1573 = vmatpush1.msra.mxu0 %v766
    %1574 = vmatprep.subr.mxu0 %v775
    %1575 = vmatpush1.msra.mxu0 %v774
    %1576 = vmatprep.subr.mxu0 %v783
    %1577 = vmatpush1.msra.mxu0 %v782
    %1578 = vmatprep.subr.mxu0 %v791
    %1579 = vmatpush1.msra.mxu0 %v790
    %1580 = vmatprep.subr.mxu0 %v799
    %1581 = vmatpush1.msra.mxu0 %v798
    %1582 = vmatprep.subr.mxu0 %v807
    %1583 = vmatpush1.msra.mxu0 %v806
    %1584 = vmatprep.subr.mxu0 %v815
    %1585 = vmatpush1.msra.mxu0 %v814
    %1586 = vmatprep.subr.mxu0 %v823
    %1587 = vmatpush1.msra.mxu0 %v822
    %1588 = vmatprep.subr.mxu0 %v831
    %1589 = vmatpush1.msra.mxu0 %v830
    %1590 = vmatprep.subr.mxu0 %v839
    %1591 = vmatpush1.msra.mxu0 %v838
    %1592 = vmatprep.subr.mxu0 %v847
    %1593 = vmatpush1.msra.mxu0 %v846
    %1594 = vmatprep.subr.mxu0 %v855
    %1595 = vmatpush1.msra.mxu0 %v854
    %1596 = vmatprep.subr.mxu0 %v863
    %1597 = vmatpush1.msra.mxu0 %v862
    %1598 = vmatprep.subr.mxu0 0.0
    %1599 = vmatpush1.msra.mxu0 0.0
    %1600 = vmatprep.subr.mxu0 0.0
    %1601 = vmatpush1.msra.mxu0 0.0
    %1602 = vmatprep.subr.mxu0 0.0
    %1603 = vmatpush1.msra.mxu0 0.0
    %1604 = vmatprep.subr.mxu0 0.0
    %1605 = vmatpush1.msra.mxu0 0.0
    %1606 = vmatprep.subr.mxu0 0.0
    %1607 = vmatpush1.msra.mxu0 0.0
    %1608 = vmatprep.subr.mxu0 0.0
    %1609 = vmatpush1.msra.mxu0 0.0
    %1610 = vmatprep.subr.mxu0 0.0
    %1611 = vmatpush1.msra.mxu0 0.0
    %1612 = vmatprep.subr.mxu0 0.0
    %1613 = vmatpush1.msra.mxu0 0.0
    %1614 = vmatprep.subr.mxu0 0.0
    %1615 = vmatpush1.msra.mxu0 0.0
    %1616 = vmatprep.subr.mxu0 0.0
    %1617 = vmatpush1.msra.mxu0 0.0
    %1618 = vmatprep.subr.mxu0 0.0
    %1619 = vmatpush1.msra.mxu0 0.0
    %1620 = vmatprep.subr.mxu0 0.0
    %1621 = vmatpush1.msra.mxu0 0.0
    %1622 = vmatprep.subr.mxu0 0.0
    %1623 = vmatpush1.msra.mxu0 0.0
    %1624 = vmatprep.subr.mxu0 0.0
    %1625 = vmatpush1.msra.mxu0 0.0
    %1626 = vmatprep.subr.mxu0 0.0
    %1627 = vmatpush1.msra.mxu0 0.0
    %1628 = vmatprep.subr.mxu0 0.0
    %1629 = vmatpush1.msra.mxu0 0.0
    %1630 = vmatprep.subr.mxu0 0.0
    %1631 = vmatpush1.msra.mxu0 0.0
    %1632 = vmatprep.subr.mxu0 0.0
    %1633 = vmatpush1.msra.mxu0 0.0
    %1634 = vmatprep.mubr.f32.mxu0 0.0
    %1635 = vmatmul.mubr.f32.gmra.mrb[0].mxu0 %v1497
    %v1636 = vpop.f32.mrb[0].mxu0
    %v1637 = vadd.f32 %v1566, %v1636
    %v1638 = vpop.f32.mrb[0].mxu0
    %v1639 = vadd.f32 %v1568, %v1638
    %1640 = vdwg.mxu0
    %1641 = vmatprep.subr.mxu0 %v505
    %1642 = vmatpush1.msra.mxu0 %v504
    %1643 = vmatprep.subr.mxu0 %v513
    %1644 = vmatpush1.msra.mxu0 %v512
    %1645 = vmatprep.subr.mxu0 %v521
    %1646 = vmatpush1.msra.mxu0 %v520
    %1647 = vmatprep.subr.mxu0 %v529
    %1648 = vmatpush1.msra.mxu0 %v528
    %1649 = vmatprep.subr.mxu0 %v537
    %1650 = vmatpush1.msra.mxu0 %v536
    %1651 = vmatprep.subr.mxu0 %v545
    %1652 = vmatpush1.msra.mxu0 %v544
    %1653 = vmatprep.subr.mxu0 %v553
    %1654 = vmatpush1.msra.mxu0 %v552
    %1655 = vmatprep.subr.mxu0 %v561
    %1656 = vmatpush1.msra.mxu0 %v560
    %1657 = vmatprep.subr.mxu0 %v569
    %1658 = vmatpush1.msra.mxu0 %v568
    %1659 = vmatprep.subr.mxu0 %v577
    %1660 = vmatpush1.msra.mxu0 %v576
    %1661 = vmatprep.subr.mxu0 %v585
    %1662 = vmatpush1.msra.mxu0 %v584
    %1663 = vmatprep.subr.mxu0 %v593
    %1664 = vmatpush1.msra.mxu0 %v592
    %1665 = vmatprep.subr.mxu0 %v601
    %1666 = vmatpush1.msra.mxu0 %v600
    %1667 = vmatprep.subr.mxu0 %v609
    %1668 = vmatpush1.msra.mxu0 %v608
    %1669 = vmatprep.subr.mxu0 %v617
    %1670 = vmatpush1.msra.mxu0 %v616
    %1671 = vmatprep.subr.mxu0 %v625
    %1672 = vmatpush1.msra.mxu0 %v624
    %1673 = vmatprep.subr.mxu0 %v633
    %1674 = vmatpush1.msra.mxu0 %v632
    %1675 = vmatprep.subr.mxu0 %v641
    %1676 = vmatpush1.msra.mxu0 %v640
    %1677 = vmatprep.subr.mxu0 %v649
    %1678 = vmatpush1.msra.mxu0 %v648
    %1679 = vmatprep.subr.mxu0 %v657
    %1680 = vmatpush1.msra.mxu0 %v656
    %1681 = vmatprep.subr.mxu0 %v665
    %1682 = vmatpush1.msra.mxu0 %v664
    %1683 = vmatprep.subr.mxu0 %v673
    %1684 = vmatpush1.msra.mxu0 %v672
    %1685 = vmatprep.subr.mxu0 %v681
    %1686 = vmatpush1.msra.mxu0 %v680
    %1687 = vmatprep.subr.mxu0 %v689
    %1688 = vmatpush1.msra.mxu0 %v688
    %1689 = vmatprep.subr.mxu0 %v697
    %1690 = vmatpush1.msra.mxu0 %v696
    %1691 = vmatprep.subr.mxu0 %v705
    %1692 = vmatpush1.msra.mxu0 %v704
    %1693 = vmatprep.subr.mxu0 %v713
    %1694 = vmatpush1.msra.mxu0 %v712
    %1695 = vmatprep.subr.mxu0 %v721
    %1696 = vmatpush1.msra.mxu0 %v720
    %1697 = vmatprep.subr.mxu0 %v729
    %1698 = vmatpush1.msra.mxu0 %v728
    %1699 = vmatprep.subr.mxu0 %v737
    %1700 = vmatpush1.msra.mxu0 %v736
    %1701 = vmatprep.subr.mxu0 %v745
    %1702 = vmatpush1.msra.mxu0 %v744
    %1703 = vmatprep.subr.mxu0 %v753
    %1704 = vmatpush1.msra.mxu0 %v752
    %1705 = vmatprep.mubr.f32.mxu0 %v1492
    %1706 = vmatmul.mubr.f32.gmra.mrb[0].mxu0 %v1491
    %v1707 = vpop.f32.mrb[0].mxu0
    %v1708 = vadd.f32 %v883, %v1707
    %v1709 = vpop.f32.mrb[0].mxu0
    %v1710 = vadd.f32 %v887, %v1709
    %1711 = vdwg.mxu0
    %1712 = vmatprep.subr.mxu0 %v761
    %1713 = vmatpush1.msra.mxu0 %v760
    %1714 = vmatprep.subr.mxu0 %v769
    %1715 = vmatpush1.msra.mxu0 %v768
    %1716 = vmatprep.subr.mxu0 %v777
    %1717 = vmatpush1.msra.mxu0 %v776
    %1718 = vmatprep.subr.mxu0 %v785
    %1719 = vmatpush1.msra.mxu0 %v784
    %1720 = vmatprep.subr.mxu0 %v793
    %1721 = vmatpush1.msra.mxu0 %v792
    %1722 = vmatprep.subr.mxu0 %v801
    %1723 = vmatpush1.msra.mxu0 %v800
    %1724 = vmatprep.subr.mxu0 %v809
    %1725 = vmatpush1.msra.mxu0 %v808
    %1726 = vmatprep.subr.mxu0 %v817
    %1727 = vmatpush1.msra.mxu0 %v816
    %1728 = vmatprep.subr.mxu0 %v825
    %1729 = vmatpush1.msra.mxu0 %v824
    %1730 = vmatprep.subr.mxu0 %v833
    %1731 = vmatpush1.msra.mxu0 %v832
    %1732 = vmatprep.subr.mxu0 %v841
    %1733 = vmatpush1.msra.mxu0 %v840
    %1734 = vmatprep.subr.mxu0 %v849
    %1735 = vmatpush1.msra.mxu0 %v848
    %1736 = vmatprep.subr.mxu0 %v857
    %1737 = vmatpush1.msra.mxu0 %v856
    %1738 = vmatprep.subr.mxu0 %v865
    %1739 = vmatpush1.msra.mxu0 %v864
    %1740 = vmatprep.subr.mxu0 0.0
    %1741 = vmatpush1.msra.mxu0 0.0
    %1742 = vmatprep.subr.mxu0 0.0
    %1743 = vmatpush1.msra.mxu0 0.0
    %1744 = vmatprep.subr.mxu0 0.0
    %1745 = vmatpush1.msra.mxu0 0.0
    %1746 = vmatprep.subr.mxu0 0.0
    %1747 = vmatpush1.msra.mxu0 0.0
    %1748 = vmatprep.subr.mxu0 0.0
    %1749 = vmatpush1.msra.mxu0 0.0
    %1750 = vmatprep.subr.mxu0 0.0
    %1751 = vmatpush1.msra.mxu0 0.0
    %1752 = vmatprep.subr.mxu0 0.0
    %1753 = vmatpush1.msra.mxu0 0.0
    %1754 = vmatprep.subr.mxu0 0.0
    %1755 = vmatpush1.msra.mxu0 0.0
    %1756 = vmatprep.subr.mxu0 0.0
    %1757 = vmatpush1.msra.mxu0 0.0
    %1758 = vmatprep.subr.mxu0 0.0
    %1759 = vmatpush1.msra.mxu0 0.0
    %1760 = vmatprep.subr.mxu0 0.0
    %1761 = vmatpush1.msra.mxu0 0.0
    %1762 = vmatprep.subr.mxu0 0.0
    %1763 = vmatpush1.msra.mxu0 0.0
    %1764 = vmatprep.subr.mxu0 0.0
    %1765 = vmatpush1.msra.mxu0 0.0
    %1766 = vmatprep.subr.mxu0 0.0
    %1767 = vmatpush1.msra.mxu0 0.0
    %1768 = vmatprep.subr.mxu0 0.0
    %1769 = vmatpush1.msra.mxu0 0.0
    %1770 = vmatprep.subr.mxu0 0.0
    %1771 = vmatpush1.msra.mxu0 0.0
    %1772 = vmatprep.subr.mxu0 0.0
    %1773 = vmatpush1.msra.mxu0 0.0
    %1774 = vmatprep.subr.mxu0 0.0
    %1775 = vmatpush1.msra.mxu0 0.0
    %1776 = vmatprep.mubr.f32.mxu0 0.0
    %1777 = vmatmul.mubr.f32.gmra.mrb[0].mxu0 %v1497
    %v1778 = vpop.f32.mrb[0].mxu0
    %v1779 = vadd.f32 %v1708, %v1778
    %v1780 = vpop.f32.mrb[0].mxu0
    %v1781 = vadd.f32 %v1710, %v1780
    %1782 = vdwg.mxu0
    %1783 = vmatprep.subr.mxu0 %v507
    %1784 = vmatpush1.msra.mxu0 %v506
    %1785 = vmatprep.subr.mxu0 %v515
    %1786 = vmatpush1.msra.mxu0 %v514
    %1787 = vmatprep.subr.mxu0 %v523
    %1788 = vmatpush1.msra.mxu0 %v522
    %1789 = vmatprep.subr.mxu0 %v531
    %1790 = vmatpush1.msra.mxu0 %v530
    %1791 = vmatprep.subr.mxu0 %v539
    %1792 = vmatpush1.msra.mxu0 %v538
    %1793 = vmatprep.subr.mxu0 %v547
    %1794 = vmatpush1.msra.mxu0 %v546
    %1795 = vmatprep.subr.mxu0 %v555
    %1796 = vmatpush1.msra.mxu0 %v554
    %1797 = vmatprep.subr.mxu0 %v563
    %1798 = vmatpush1.msra.mxu0 %v562
    %1799 = vmatprep.subr.mxu0 %v571
    %1800 = vmatpush1.msra.mxu0 %v570
    %1801 = vmatprep.subr.mxu0 %v579
    %1802 = vmatpush1.msra.mxu0 %v578
    %1803 = vmatprep.subr.mxu0 %v587
    %1804 = vmatpush1.msra.mxu0 %v586
    %1805 = vmatprep.subr.mxu0 %v595
    %1806 = vmatpush1.msra.mxu0 %v594
    %1807 = vmatprep.subr.mxu0 %v603
    %1808 = vmatpush1.msra.mxu0 %v602
    %1809 = vmatprep.subr.mxu0 %v611
    %1810 = vmatpush1.msra.mxu0 %v610
    %1811 = vmatprep.subr.mxu0 %v619
    %1812 = vmatpush1.msra.mxu0 %v618
    %1813 = vmatprep.subr.mxu0 %v627
    %1814 = vmatpush1.msra.mxu0 %v626
    %1815 = vmatprep.subr.mxu0 %v635
    %1816 = vmatpush1.msra.mxu0 %v634
    %1817 = vmatprep.subr.mxu0 %v643
    %1818 = vmatpush1.msra.mxu0 %v642
    %1819 = vmatprep.subr.mxu0 %v651
    %1820 = vmatpush1.msra.mxu0 %v650
    %1821 = vmatprep.subr.mxu0 %v659
    %1822 = vmatpush1.msra.mxu0 %v658
    %1823 = vmatprep.subr.mxu0 %v667
    %1824 = vmatpush1.msra.mxu0 %v666
    %1825 = vmatprep.subr.mxu0 %v675
    %1826 = vmatpush1.msra.mxu0 %v674
    %1827 = vmatprep.subr.mxu0 %v683
    %1828 = vmatpush1.msra.mxu0 %v682
    %1829 = vmatprep.subr.mxu0 %v691
    %1830 = vmatpush1.msra.mxu0 %v690
    %1831 = vmatprep.subr.mxu0 %v699
    %1832 = vmatpush1.msra.mxu0 %v698
    %1833 = vmatprep.subr.mxu0 %v707
    %1834 = vmatpush1.msra.mxu0 %v706
    %1835 = vmatprep.subr.mxu0 %v715
    %1836 = vmatpush1.msra.mxu0 %v714
    %1837 = vmatprep.subr.mxu0 %v723
    %1838 = vmatpush1.msra.mxu0 %v722
    %1839 = vmatprep.subr.mxu0 %v731
    %1840 = vmatpush1.msra.mxu0 %v730
    %1841 = vmatprep.subr.mxu0 %v739
    %1842 = vmatpush1.msra.mxu0 %v738
    %1843 = vmatprep.subr.mxu0 %v747
    %1844 = vmatpush1.msra.mxu0 %v746
    %1845 = vmatprep.subr.mxu0 %v755
    %1846 = vmatpush1.msra.mxu0 %v754
    %1847 = vmatprep.mubr.f32.mxu0 %v1492
    %1848 = vmatmul.mubr.f32.gmra.mrb[0].mxu0 %v1491
    %v1849 = vpop.f32.mrb[0].mxu0
    %v1850 = vadd.f32 %v891, %v1849
    %v1851 = vpop.f32.mrb[0].mxu0
    %v1852 = vadd.f32 %v895, %v1851
    %1853 = vdwg.mxu0
    %1854 = vmatprep.subr.mxu0 %v763
    %1855 = vmatpush1.msra.mxu0 %v762
    %1856 = vmatprep.subr.mxu0 %v771
    %1857 = vmatpush1.msra.mxu0 %v770
    %1858 = vmatprep.subr.mxu0 %v779
    %1859 = vmatpush1.msra.mxu0 %v778
    %1860 = vmatprep.subr.mxu0 %v787
    %1861 = vmatpush1.msra.mxu0 %v786
    %1862 = vmatprep.subr.mxu0 %v795
    %1863 = vmatpush1.msra.mxu0 %v794
    %1864 = vmatprep.subr.mxu0 %v803
    %1865 = vmatpush1.msra.mxu0 %v802
    %1866 = vmatprep.subr.mxu0 %v811
    %1867 = vmatpush1.msra.mxu0 %v810
    %1868 = vmatprep.subr.mxu0 %v819
    %1869 = vmatpush1.msra.mxu0 %v818
    %1870 = vmatprep.subr.mxu0 %v827
    %1871 = vmatpush1.msra.mxu0 %v826
    %1872 = vmatprep.subr.mxu0 %v835
    %1873 = vmatpush1.msra.mxu0 %v834
    %1874 = vmatprep.subr.mxu0 %v843
    %1875 = vmatpush1.msra.mxu0 %v842
    %1876 = vmatprep.subr.mxu0 %v851
    %1877 = vmatpush1.msra.mxu0 %v850
    %1878 = vmatprep.subr.mxu0 %v859
    %1879 = vmatpush1.msra.mxu0 %v858
    %1880 = vmatprep.subr.mxu0 %v867
    %1881 = vmatpush1.msra.mxu0 %v866
    %1882 = vmatprep.subr.mxu0 0.0
    %1883 = vmatpush1.msra.mxu0 0.0
    %1884 = vmatprep.subr.mxu0 0.0
    %1885 = vmatpush1.msra.mxu0 0.0
    %1886 = vmatprep.subr.mxu0 0.0
    %1887 = vmatpush1.msra.mxu0 0.0
    %1888 = vmatprep.subr.mxu0 0.0
    %1889 = vmatpush1.msra.mxu0 0.0
    %1890 = vmatprep.subr.mxu0 0.0
    %1891 = vmatpush1.msra.mxu0 0.0
    %1892 = vmatprep.subr.mxu0 0.0
    %1893 = vmatpush1.msra.mxu0 0.0
    %1894 = vmatprep.subr.mxu0 0.0
    %1895 = vmatpush1.msra.mxu0 0.0
    %1896 = vmatprep.subr.mxu0 0.0
    %1897 = vmatpush1.msra.mxu0 0.0
    %1898 = vmatprep.subr.mxu0 0.0
    %1899 = vmatpush1.msra.mxu0 0.0
    %1900 = vmatprep.subr.mxu0 0.0
    %1901 = vmatpush1.msra.mxu0 0.0
    %1902 = vmatprep.subr.mxu0 0.0
    %1903 = vmatpush1.msra.mxu0 0.0
    %1904 = vmatprep.subr.mxu0 0.0
    %1905 = vmatpush1.msra.mxu0 0.0
    %1906 = vmatprep.subr.mxu0 0.0
    %1907 = vmatpush1.msra.mxu0 0.0
    %1908 = vmatprep.subr.mxu0 0.0
    %1909 = vmatpush1.msra.mxu0 0.0
    %1910 = vmatprep.subr.mxu0 0.0
    %1911 = vmatpush1.msra.mxu0 0.0
    %1912 = vmatprep.subr.mxu0 0.0
    %1913 = vmatpush1.msra.mxu0 0.0
    %1914 = vmatprep.subr.mxu0 0.0
    %1915 = vmatpush1.msra.mxu0 0.0
    %1916 = vmatprep.subr.mxu0 0.0
    %1917 = vmatpush1.msra.mxu0 0.0
    %1918 = vmatprep.mubr.f32.mxu0 0.0
    %1919 = vmatmul.mubr.f32.gmra.mrb[0].mxu0 %v1497
    %v1920 = vpop.f32.mrb[0].mxu0
    %v1921 = vadd.f32 %v1850, %v1920
    %v1922 = vpop.f32.mrb[0].mxu0
    %v1923 = vadd.f32 %v1852, %v1922
    %1924 = vdwg.mxu0
    %1925 = vmatprep.subr.mxu0 %v509
    %1926 = vmatpush1.msra.mxu0 %v508
    %1927 = vmatprep.subr.mxu0 %v517
    %1928 = vmatpush1.msra.mxu0 %v516
    %1929 = vmatprep.subr.mxu0 %v525
    %1930 = vmatpush1.msra.mxu0 %v524
    %1931 = vmatprep.subr.mxu0 %v533
    %1932 = vmatpush1.msra.mxu0 %v532
    %1933 = vmatprep.subr.mxu0 %v541
    %1934 = vmatpush1.msra.mxu0 %v540
    %1935 = vmatprep.subr.mxu0 %v549
    %1936 = vmatpush1.msra.mxu0 %v548
    %1937 = vmatprep.subr.mxu0 %v557
    %1938 = vmatpush1.msra.mxu0 %v556
    %1939 = vmatprep.subr.mxu0 %v565
    %1940 = vmatpush1.msra.mxu0 %v564
    %1941 = vmatprep.subr.mxu0 %v573
    %1942 = vmatpush1.msra.mxu0 %v572
    %1943 = vmatprep.subr.mxu0 %v581
    %1944 = vmatpush1.msra.mxu0 %v580
    %1945 = vmatprep.subr.mxu0 %v589
    %1946 = vmatpush1.msra.mxu0 %v588
    %1947 = vmatprep.subr.mxu0 %v597
    %1948 = vmatpush1.msra.mxu0 %v596
    %1949 = vmatprep.subr.mxu0 %v605
    %1950 = vmatpush1.msra.mxu0 %v604
    %1951 = vmatprep.subr.mxu0 %v613
    %1952 = vmatpush1.msra.mxu0 %v612
    %1953 = vmatprep.subr.mxu0 %v621
    %1954 = vmatpush1.msra.mxu0 %v620
    %1955 = vmatprep.subr.mxu0 %v629
    %1956 = vmatpush1.msra.mxu0 %v628
    %1957 = vmatprep.subr.mxu0 %v637
    %1958 = vmatpush1.msra.mxu0 %v636
    %1959 = vmatprep.subr.mxu0 %v645
    %1960 = vmatpush1.msra.mxu0 %v644
    %1961 = vmatprep.subr.mxu0 %v653
    %1962 = vmatpush1.msra.mxu0 %v652
    %1963 = vmatprep.subr.mxu0 %v661
    %1964 = vmatpush1.msra.mxu0 %v660
    %1965 = vmatprep.subr.mxu0 %v669
    %1966 = vmatpush1.msra.mxu0 %v668
    %1967 = vmatprep.subr.mxu0 %v677
    %1968 = vmatpush1.msra.mxu0 %v676
    %1969 = vmatprep.subr.mxu0 %v685
    %1970 = vmatpush1.msra.mxu0 %v684
    %1971 = vmatprep.subr.mxu0 %v693
    %1972 = vmatpush1.msra.mxu0 %v692
    %1973 = vmatprep.subr.mxu0 %v701
    %1974 = vmatpush1.msra.mxu0 %v700
    %1975 = vmatprep.subr.mxu0 %v709
    %1976 = vmatpush1.msra.mxu0 %v708
    %1977 = vmatprep.subr.mxu0 %v717
    %1978 = vmatpush1.msra.mxu0 %v716
    %1979 = vmatprep.subr.mxu0 %v725
    %1980 = vmatpush1.msra.mxu0 %v724
    %1981 = vmatprep.subr.mxu0 %v733
    %1982 = vmatpush1.msra.mxu0 %v732
    %1983 = vmatprep.subr.mxu0 %v741
    %1984 = vmatpush1.msra.mxu0 %v740
    %1985 = vmatprep.subr.mxu0 %v749
    %1986 = vmatpush1.msra.mxu0 %v748
    %1987 = vmatprep.subr.mxu0 %v757
    %1988 = vmatpush1.msra.mxu0 %v756
    %1989 = vmatprep.mubr.f32.mxu0 %v1492
    %1990 = vmatmul.mubr.f32.gmra.mrb[0].mxu0 %v1491
    %v1991 = vpop.f32.mrb[0].mxu0
    %v1992 = vadd.f32 %v899, %v1991
    %v1993 = vpop.f32.mrb[0].mxu0
    %v1994 = vadd.f32 %v903, %v1993
    %1995 = vdwg.mxu0
    %1996 = vmatprep.subr.mxu0 %v765
    %1997 = vmatpush1.msra.mxu0 %v764
    %1998 = vmatprep.subr.mxu0 %v773
    %1999 = vmatpush1.msra.mxu0 %v772
    %2000 = vmatprep.subr.mxu0 %v781
    %2001 = vmatpush1.msra.mxu0 %v780
    %2002 = vmatprep.subr.mxu0 %v789
    %2003 = vmatpush1.msra.mxu0 %v788
    %2004 = vmatprep.subr.mxu0 %v797
    %2005 = vmatpush1.msra.mxu0 %v796
    %2006 = vmatprep.subr.mxu0 %v805
    %2007 = vmatpush1.msra.mxu0 %v804
    %2008 = vmatprep.subr.mxu0 %v813
    %2009 = vmatpush1.msra.mxu0 %v812
    %2010 = vmatprep.subr.mxu0 %v821
    %2011 = vmatpush1.msra.mxu0 %v820
    %2012 = vmatprep.subr.mxu0 %v829
    %2013 = vmatpush1.msra.mxu0 %v828
    %2014 = vmatprep.subr.mxu0 %v837
    %2015 = vmatpush1.msra.mxu0 %v836
    %2016 = vmatprep.subr.mxu0 %v845
    %2017 = vmatpush1.msra.mxu0 %v844
    %2018 = vmatprep.subr.mxu0 %v853
    %2019 = vmatpush1.msra.mxu0 %v852
    %2020 = vmatprep.subr.mxu0 %v861
    %2021 = vmatpush1.msra.mxu0 %v860
    %2022 = vmatprep.subr.mxu0 %v869
    %2023 = vmatpush1.msra.mxu0 %v868
    %2024 = vmatprep.subr.mxu0 0.0
    %2025 = vmatpush1.msra.mxu0 0.0
    %2026 = vmatprep.subr.mxu0 0.0
    %2027 = vmatpush1.msra.mxu0 0.0
    %2028 = vmatprep.subr.mxu0 0.0
    %2029 = vmatpush1.msra.mxu0 0.0
    %2030 = vmatprep.subr.mxu0 0.0
    %2031 = vmatpush1.msra.mxu0 0.0
    %2032 = vmatprep.subr.mxu0 0.0
    %2033 = vmatpush1.msra.mxu0 0.0
    %2034 = vmatprep.subr.mxu0 0.0
    %2035 = vmatpush1.msra.mxu0 0.0
    %2036 = vmatprep.subr.mxu0 0.0
    %2037 = vmatpush1.msra.mxu0 0.0
    %2038 = vmatprep.subr.mxu0 0.0
    %2039 = vmatpush1.msra.mxu0 0.0
    %2040 = vmatprep.subr.mxu0 0.0
    %2041 = vmatpush1.msra.mxu0 0.0
    %2042 = vmatprep.subr.mxu0 0.0
    %2043 = vmatpush1.msra.mxu0 0.0
    %2044 = vmatprep.subr.mxu0 0.0
    %2045 = vmatpush1.msra.mxu0 0.0
    %2046 = vmatprep.subr.mxu0 0.0
    %2047 = vmatpush1.msra.mxu0 0.0
    %2048 = vmatprep.subr.mxu0 0.0
    %2049 = vmatpush1.msra.mxu0 0.0
    %2050 = vmatprep.subr.mxu0 0.0
    %2051 = vmatpush1.msra.mxu0 0.0
    %2052 = vmatprep.subr.mxu0 0.0
    %2053 = vmatpush1.msra.mxu0 0.0
    %2054 = vmatprep.subr.mxu0 0.0
    %2055 = vmatpush1.msra.mxu0 0.0
    %2056 = vmatprep.subr.mxu0 0.0
    %2057 = vmatpush1.msra.mxu0 0.0
    %2058 = vmatprep.subr.mxu0 0.0
    %2059 = vmatpush1.msra.mxu0 0.0
    %2060 = vmatprep.mubr.f32.mxu0 0.0
    %2061 = vmatmul.mubr.f32.gmra.mrb[0].mxu0 %v1497
    %v2062 = vpop.f32.mrb[0].mxu0
    %v2063 = vadd.f32 %v1992, %v2062
    %v2064 = vpop.f32.mrb[0].mxu0
    %v2065 = vadd.f32 %v1994, %v2064
    %2066 = vdwg.mxu0
    %v2075 = vcombine.low %v1637, %v1639
    %v2076 = vcombine.low %v1779, %v1781
    %v2078 = vunpack.c.l.s4 1983009808
    %v2079 = vunpack.c.0.s8 %v2078
    %v2080 = vlaneseq
    %v2081 = vshrl.u32 %v2080, 7
    %v2082 = vsub.s32 %v2079, %v2081
    %v2083 = vrot.slane %v2075, %v2082
    %v2085 = vunpack.c.l.s4 1983009808
    %v2086 = vunpack.c.0.s8 %v2085
    %v2087 = vlaneseq
    %v2088 = vshrl.u32 %v2087, 7
    %v2089 = vsub.s32 %v2086, %v2088
    %v2090 = vrot.slane %v2076, %v2089
    %v2091 = vcombine.low %v2083, %v2090
    %v2092 = vcombine.low %v1921, %v1923
    %v2093 = vcombine.low %v2063, %v2065
    %v2095 = vunpack.c.l.s4 1983009808
    %v2096 = vunpack.c.0.s8 %v2095
    %v2097 = vlaneseq
    %v2098 = vshrl.u32 %v2097, 7
    %v2099 = vsub.s32 %v2096, %v2098
    %v2100 = vrot.slane %v2092, %v2099
    %v2102 = vunpack.c.l.s4 1983009808
    %v2103 = vunpack.c.0.s8 %v2102
    %v2104 = vlaneseq
    %v2105 = vshrl.u32 %v2104, 7
    %v2106 = vsub.s32 %v2103, %v2105
    %v2107 = vrot.slane %v2093, %v2106
    %v2108 = vcombine.low %v2100, %v2107
    %2111 = vst [vmem:[#allocation7] sm:$0xff] %v2091
    %2112 = vst [vmem:[#allocation7 + $0x8] sm:$0xff] %v2108
    // Predicated region
    $region22: #{tpu_custom_call.1} parent=1 // pred_check
      _
    $region23: #{tpu_custom_call.1} parent=1 // pred_check_branch
      %2114 = sbr.rel (0) target = $region25
    $region24: #{tpu_custom_call.1} parent=1 // pred_region
      %s2116 = ssub.s32 256, 256
      %2117 = vsyncadd [#allocation4], %s2116
      %s2119 = sshll.u32 [#allocation7], 4
      %s2120 = int_to_ptr.vmem [resolvable:$true] %s2119
      %2122 = dma.vmem_to_hbm [thread:$0]  %s2120, 256, %s3, [#allocation4]
    $region25: #{tpu_custom_call.1} parent=1 // pred_fallthru
      _
    // Predicated region
    $region26: #{tpu_custom_call.1} parent=1 // pred_check
      _
    $region27: #{tpu_custom_call.1} parent=1 // pred_check_branch
      %2124 = sbr.rel (0) target = $region29
    $region28: #{tpu_custom_call.1} parent=1 // pred_region
      %2125 = dma.done [#allocation4], 256
    $region29: #{tpu_custom_call.1} parent=1 // pred_fallthru
      _
    %2126 = vsyncpa [#allocation3], 1
    %2127 = vsyncpa [#allocation6], 1
    %2128 = vsyncpa [#allocation4], 1

</llo_original>
